<compile_context>
chip_gen: v6e
topology: v6e:2x2x1
jax: 0.10.0
libtpu: 0.0.40
codegen_flags: <defaults>
</compile_context>

<pallas_src>
import jax
import jax.numpy as jnp
from jax.experimental import pallas as pl
from jax.experimental.pallas import tpu as pltpu


# ----------------------------- Pallas kernel -------------------------------

def _lstm_net_kernel(x2d_ref,             # (B*T, I)   batch-first, row = b*T + t
                     h0_ref, c0_ref,      # (2, B, H)  initial states
                     wih0_ref, b0_ref,    # (I, 4H), (1, 4H)   layer-0 input proj
                     whhblk_ref,          # (2H, 8H)   blkdiag(whh0, whh1)
                     wih1_ref, b1_ref,    # (H, 4H), (1, 4H)   layer-1 input proj
                     wfc_ref, bfc_ref,    # (H, O), (1, O)     head
                     out_ref, hn_ref, cn_ref):   # (B, O), (2, B, H), (2, B, H)
    _, B, H = h0_ref.shape
    BT = x2d_ref.shape[0]
    T = BT // B
    H4 = 4 * H

    # ---- hoisted: layer-0 input projection for all timesteps at once -------
    gx = (jnp.dot(x2d_ref[...], wih0_ref[...],
                  preferred_element_type=jnp.float32)
          + b0_ref[...])                       # (B*T, 4H), bias folded in once
    gx = gx.reshape(B, T, H4)

    # ---- hoisted loop invariants --------------------------------------------
    whh_blk = whhblk_ref[...]                  # (2H, 8H)
    wih1 = wih1_ref[...]                       # (H, 4H)
    b1b = jnp.broadcast_to(b1_ref[...], (B, H4))

    def lstm_cell(gates, c_prev):
        i = jax.nn.sigmoid(gates[:, 0 * H:1 * H])
        f = jax.nn.sigmoid(gates[:, 1 * H:2 * H])
        g = jnp.tanh(gates[:, 2 * H:3 * H])
        o = jax.nn.sigmoid(gates[:, 3 * H:4 * H])
        c_new = f * c_prev + i * g
        h_new = o * jnp.tanh(c_new)
        return h_new, c_new

    h0 = h0_ref[0]
    c0 = c0_ref[0]
    h1 = h0_ref[1]
    c1 = c0_ref[1]

    # Fully unrolled recurrence (T static & small): lets the scheduler overlap
    # the block-diag hh matmul, wih1 matmul, EUP transcendentals and VPU
    # elementwise work across adjacent steps / layers.
    for t in range(T):
        # one block-diagonal matmul -> both layers' h @ Whh contributions
        hh = jnp.dot(jnp.concatenate([h0, h1], axis=-1), whh_blk,
                     preferred_element_type=jnp.float32)       # (B, 8H)
        # layer 0
        g0 = gx[:, t, :] + hh[:, :H4]
        h0, c0 = lstm_cell(g0, c0)
        # layer 1 (consumes layer-0 output of the same timestep;
        #          hh[:, H4:] uses h1 from the *previous* step, as required)
        g1 = (jnp.dot(h0, wih1, preferred_element_type=jnp.float32)
              + hh[:, H4:] + b1b)
        h1, c1 = lstm_cell(g1, c1)

    hn_ref[0] = h0
    hn_ref[1] = h1
    cn_ref[0] = c0
    cn_ref[1] = c1

    # head: fc(relu(out[:, -1])), where out[:, -1] == top-layer last hidden
    last = jnp.maximum(h1, 0.0)
    out_ref[...] = (jnp.dot(last, wfc_ref[...],
                            preferred_element_type=jnp.float32)
                    + bfc_ref[...])


# ------------------------------ wrapper -------------------------------------

@jax.jit
def lstm_net_forward(x_btI, h0, c0, params):
    """x_btI: (B, T, I) batch-first (like PyTorch); h0, c0: (n_layers, B, H)."""
    B, T, I = x_btI.shape
    n_layers, _, H = h0.shape
    O = params["wfc"].shape[1]

    # Block-diagonal recurrent weight so [h0 | h1] @ blk == [h0@whh0 | h1@whh1].
    whh_blk = jnp.zeros((2 * H, 8 * H), jnp.float32)
    whh_blk = whh_blk.at[:H, :4 * H].set(params["whh0"])
    whh_blk = whh_blk.at[H:, 4 * H:].set(params["whh1"])

    # Contiguous collapse only — no transpose / extra HBM pass.
    x2d = x_btI.reshape(B * T, I)

    vmem = pl.BlockSpec(memory_space=pltpu.MemorySpace.VMEM)
    out, hn, cn = pl.pallas_call(
        _lstm_net_kernel,
        out_shape=(
            jax.ShapeDtypeStruct((B, O), jnp.float32),
            jax.ShapeDtypeStruct((n_layers, B, H), jnp.float32),
            jax.ShapeDtypeStruct((n_layers, B, H), jnp.float32),
        ),
        in_specs=[vmem] * 10,
        out_specs=(vmem, vmem, vmem),
        input_output_aliases={1: 1, 2: 2},   # hn/cn reuse the h0/c0 buffers
    )(x2d, h0, c0,
      params["wih0"], params["b0"], whh_blk,
      params["wih1"], params["b1"],
      params["wfc"], params["bfc"])
    return out, (hn, cn)


# ------------------------- deterministic params ------------------------------

def init_params(key, input_dim, hidden_dim, output_dim):
    H = hidden_dim
    bound = 1.0 / jnp.sqrt(jnp.float32(H))
    keys = jax.random.split(key, 10)

    def u(k, shape):
        return jax.random.uniform(k, shape, jnp.float32, -bound, bound)

    # PyTorch stores weight_ih as (4H, in); we keep the transpose (in, 4H).
    wih0 = u(keys[0], (input_dim, 4 * H))
    whh0 = u(keys[1], (H, 4 * H))
    b0 = (u(keys[2], (1, 4 * H)) + u(keys[3], (1, 4 * H)))   # bias_ih + bias_hh
    wih1 = u(keys[4], (H, 4 * H))
    whh1 = u(keys[5], (H, 4 * H))
    b1 = (u(keys[6], (1, 4 * H)) + u(keys[7], (1, 4 * H)))
    wfc = u(keys[8], (H, output_dim))
    bfc = u(keys[9], (1, output_dim))
    return dict(wih0=wih0, whh0=whh0, b0=b0,
                wih1=wih1, whh1=whh1, b1=b1,
                wfc=wfc, bfc=bfc)


# --------------------------- pure-JAX reference ------------------------------

def reference_forward(x, h0, c0, params):
    B, T, I = x.shape
    H = h0.shape[-1]

    def cell(gates, c_prev):
        i = jax.nn.sigmoid(gates[:, 0 * H:1 * H])
        f = jax.nn.sigmoid(gates[:, 1 * H:2 * H])
        g = jnp.tanh(gates[:, 2 * H:3 * H])
        o = jax.nn.sigmoid(gates[:, 3 * H:4 * H])
        c = f * c_prev + i * g
        return o * jnp.tanh(c), c

    h0_, c0_, h1_, c1_ = h0[0], c0[0], h0[1], c0[1]
    for t in range(T):
        xt = x[:, t]
        g0 = xt @ params["wih0"] + h0_ @ params["whh0"] + params["b0"]
        h0_, c0_ = cell(g0, c0_)
        g1 = h0_ @ params["wih1"] + h1_ @ params["whh1"] + params["b1"]
        h1_, c1_ = cell(g1, c1_)
    out = jnp.maximum(h1_, 0.0) @ params["wfc"] + params["bfc"]
    return out, (jnp.stack([h0_, h1_]), jnp.stack([c0_, c1_]))


# ----------------------------------- main ------------------------------------

if __name__ == "__main__":
    # small shapes consistent with the module's forward
    batch, seq = 2, 8
    input_dim, hidden_dim, output_dim, n_layers = 5, 32, 1, 2

    key = jax.random.PRNGKey(0)
    kx, kp = jax.random.split(key)
    x = jax.random.normal(kx, (batch, seq, input_dim), jnp.float32)
    h0 = jnp.zeros((n_layers, batch, hidden_dim), jnp.float32)  # init_hidden
    c0 = jnp.zeros((n_layers, batch, hidden_dim), jnp.float32)
    params = init_params(kp, input_dim, hidden_dim, output_dim)

    out, (hn, cn) = lstm_net_forward(x, h0, c0, params)
    jax.block_until_ready((out, hn, cn))

    ref_out, (ref_hn, ref_cn) = reference_forward(x, h0, c0, params)
    assert jnp.allclose(out, ref_out, atol=1e-5, rtol=1e-5)
    assert jnp.allclose(hn, ref_hn, atol=1e-5, rtol=1e-5)
    assert jnp.allclose(cn, ref_cn, atol=1e-5, rtol=1e-5)

    print("KERNEL_OK")
</pallas_src>

<mosaic_0001>
module attributes {stable_mosaic.version = 11 : i64} {
  func.func @_lstm_net_kernel(%arg0: memref<16x5xf32, #tpu.memory_space<vmem>>, %arg1: memref<2x2x32xf32, #tpu.memory_space<vmem>>, %arg2: memref<2x2x32xf32, #tpu.memory_space<vmem>>, %arg3: memref<5x128xf32, #tpu.memory_space<vmem>>, %arg4: memref<1x128xf32, #tpu.memory_space<vmem>>, %arg5: memref<64x256xf32, #tpu.memory_space<vmem>>, %arg6: memref<32x128xf32, #tpu.memory_space<vmem>>, %arg7: memref<1x128xf32, #tpu.memory_space<vmem>>, %arg8: memref<32x1xf32, #tpu.memory_space<vmem>>, %arg9: memref<1x1xf32, #tpu.memory_space<vmem>>, %arg10: memref<2x1xf32, #tpu.memory_space<vmem>>, %arg11: memref<2x2x32xf32, #tpu.memory_space<vmem>>, %arg12: memref<2x2x32xf32, #tpu.memory_space<vmem>>) attributes {dimension_semantics = [], scalar_prefetch = 0 : i64, scratch_operands = 0 : i64, tpu.core_type = #tpu.core_type<tc>} {
    %c0 = arith.constant 0 : index
    %c0_0 = arith.constant 0 : index
    %0 = vector.load %arg0[%c0, %c0_0] : memref<16x5xf32, #tpu.memory_space<vmem>>, vector<16x5xf32>
    %c0_1 = arith.constant 0 : index
    %c0_2 = arith.constant 0 : index
    %1 = vector.load %arg3[%c0_1, %c0_2] : memref<5x128xf32, #tpu.memory_space<vmem>>, vector<5x128xf32>
    %cst = arith.constant dense<0.000000e+00> : vector<16x128xf32>
    %2 = tpu.matmul %0, %1, %cst {dimension_numbers = #tpu.dot_dimension_numbers<[1], [0], [0], [1], [0, 0, 1, 1], [], []>} : vector<16x5xf32>, vector<5x128xf32>, vector<16x128xf32> -> vector<16x128xf32>
    %c0_3 = arith.constant 0 : index
    %c0_4 = arith.constant 0 : index
    %3 = vector.load %arg4[%c0_3, %c0_4] : memref<1x128xf32, #tpu.memory_space<vmem>>, vector<1x128xf32>
    %4 = vector.broadcast %3 : vector<1x128xf32> to vector<16x128xf32>
    %5 = arith.addf %2, %4 : vector<16x128xf32>
    %6 = vector.shape_cast %5 : vector<16x128xf32> to vector<2x8x128xf32>
    %c0_5 = arith.constant 0 : index
    %c0_6 = arith.constant 0 : index
    %7 = vector.load %arg5[%c0_5, %c0_6] : memref<64x256xf32, #tpu.memory_space<vmem>>, vector<64x256xf32>
    %c0_7 = arith.constant 0 : index
    %c0_8 = arith.constant 0 : index
    %8 = vector.load %arg6[%c0_7, %c0_8] : memref<32x128xf32, #tpu.memory_space<vmem>>, vector<32x128xf32>
    %c0_9 = arith.constant 0 : index
    %c0_10 = arith.constant 0 : index
    %9 = vector.load %arg7[%c0_9, %c0_10] : memref<1x128xf32, #tpu.memory_space<vmem>>, vector<1x128xf32>
    %10 = vector.shape_cast %9 : vector<1x128xf32> to vector<1x128xf32>
    %11 = vector.broadcast %10 : vector<1x128xf32> to vector<2x128xf32>
    %c0_11 = arith.constant 0 : index
    %c0_12 = arith.constant 0 : index
    %c0_13 = arith.constant 0 : index
    %12 = vector.load %arg1[%c0_11, %c0_12, %c0_13] : memref<2x2x32xf32, #tpu.memory_space<vmem>>, vector<1x2x32xf32>
    %13 = vector.shape_cast %12 : vector<1x2x32xf32> to vector<2x32xf32>
    %c0_14 = arith.constant 0 : index
    %c0_15 = arith.constant 0 : index
    %c0_16 = arith.constant 0 : index
    %14 = vector.load %arg2[%c0_14, %c0_15, %c0_16] : memref<2x2x32xf32, #tpu.memory_space<vmem>>, vector<1x2x32xf32>
    %15 = vector.shape_cast %14 : vector<1x2x32xf32> to vector<2x32xf32>
    %c1 = arith.constant 1 : index
    %c0_17 = arith.constant 0 : index
    %c0_18 = arith.constant 0 : index
    %16 = vector.load %arg1[%c1, %c0_17, %c0_18] : memref<2x2x32xf32, #tpu.memory_space<vmem>>, vector<1x2x32xf32>
    %17 = vector.shape_cast %16 : vector<1x2x32xf32> to vector<2x32xf32>
    %c1_19 = arith.constant 1 : index
    %c0_20 = arith.constant 0 : index
    %c0_21 = arith.constant 0 : index
    %18 = vector.load %arg2[%c1_19, %c0_20, %c0_21] : memref<2x2x32xf32, #tpu.memory_space<vmem>>, vector<1x2x32xf32>
    %19 = vector.shape_cast %18 : vector<1x2x32xf32> to vector<2x32xf32>
    %20 = tpu.concatenate %13, %17 in 1 : vector<2x32xf32>, vector<2x32xf32> -> vector<2x64xf32>
    %cst_22 = arith.constant dense<0.000000e+00> : vector<2x256xf32>
    %21 = tpu.matmul %20, %7, %cst_22 {dimension_numbers = #tpu.dot_dimension_numbers<[1], [0], [0], [1], [0, 0, 1, 1], [], []>} : vector<2x64xf32>, vector<64x256xf32>, vector<2x256xf32> -> vector<2x256xf32>
    %22 = vector.extract_strided_slice %6 {offsets = [0, 0, 0], sizes = [2, 1, 128], strides = [1, 1, 1]} : vector<2x8x128xf32> to vector<2x1x128xf32>
    %23 = vector.shape_cast %22 : vector<2x1x128xf32> to vector<2x128xf32>
    %24 = vector.extract_strided_slice %21 {offsets = [0, 0], sizes = [2, 128], strides = [1, 1]} : vector<2x256xf32> to vector<2x128xf32>
    %25 = arith.addf %23, %24 : vector<2x128xf32>
    %26 = vector.extract_strided_slice %25 {offsets = [0, 0], sizes = [2, 32], strides = [1, 1]} : vector<2x128xf32> to vector<2x32xf32>
    %27 = arith.negf %26 : vector<2x32xf32>
    %28 = math.exp %27 : vector<2x32xf32>
    %cst_23 = arith.constant 1.000000e+00 : f32
    %29 = vector.broadcast %cst_23 : f32 to vector<2x32xf32>
    %30 = arith.addf %29, %28 : vector<2x32xf32>
    %31 = arith.divf %29, %30 : vector<2x32xf32>
    %32 = vector.extract_strided_slice %25 {offsets = [0, 32], sizes = [2, 32], strides = [1, 1]} : vector<2x128xf32> to vector<2x32xf32>
    %33 = arith.negf %32 : vector<2x32xf32>
    %34 = math.exp %33 : vector<2x32xf32>
    %cst_24 = arith.constant 1.000000e+00 : f32
    %35 = vector.broadcast %cst_24 : f32 to vector<2x32xf32>
    %36 = arith.addf %35, %34 : vector<2x32xf32>
    %37 = arith.divf %35, %36 : vector<2x32xf32>
    %38 = vector.extract_strided_slice %25 {offsets = [0, 64], sizes = [2, 32], strides = [1, 1]} : vector<2x128xf32> to vector<2x32xf32>
    %39 = math.tanh %38 : vector<2x32xf32>
    %40 = vector.extract_strided_slice %25 {offsets = [0, 96], sizes = [2, 32], strides = [1, 1]} : vector<2x128xf32> to vector<2x32xf32>
    %41 = arith.negf %40 : vector<2x32xf32>
    %42 = math.exp %41 : vector<2x32xf32>
    %cst_25 = arith.constant 1.000000e+00 : f32
    %43 = vector.broadcast %cst_25 : f32 to vector<2x32xf32>
    %44 = arith.addf %43, %42 : vector<2x32xf32>
    %45 = arith.divf %43, %44 : vector<2x32xf32>
    %46 = arith.mulf %37, %15 : vector<2x32xf32>
    %47 = arith.mulf %31, %39 : vector<2x32xf32>
    %48 = arith.addf %46, %47 : vector<2x32xf32>
    %49 = math.tanh %48 : vector<2x32xf32>
    %50 = arith.mulf %45, %49 : vector<2x32xf32>
    %cst_26 = arith.constant dense<0.000000e+00> : vector<2x128xf32>
    %51 = tpu.matmul %50, %8, %cst_26 {dimension_numbers = #tpu.dot_dimension_numbers<[1], [0], [0], [1], [0, 0, 1, 1], [], []>} : vector<2x32xf32>, vector<32x128xf32>, vector<2x128xf32> -> vector<2x128xf32>
    %52 = vector.extract_strided_slice %21 {offsets = [0, 128], sizes = [2, 128], strides = [1, 1]} : vector<2x256xf32> to vector<2x128xf32>
    %53 = arith.addf %51, %52 : vector<2x128xf32>
    %54 = arith.addf %53, %11 : vector<2x128xf32>
    %55 = vector.extract_strided_slice %54 {offsets = [0, 0], sizes = [2, 32], strides = [1, 1]} : vector<2x128xf32> to vector<2x32xf32>
    %56 = arith.negf %55 : vector<2x32xf32>
    %57 = math.exp %56 : vector<2x32xf32>
    %cst_27 = arith.constant 1.000000e+00 : f32
    %58 = vector.broadcast %cst_27 : f32 to vector<2x32xf32>
    %59 = arith.addf %58, %57 : vector<2x32xf32>
    %60 = arith.divf %58, %59 : vector<2x32xf32>
    %61 = vector.extract_strided_slice %54 {offsets = [0, 32], sizes = [2, 32], strides = [1, 1]} : vector<2x128xf32> to vector<2x32xf32>
    %62 = arith.negf %61 : vector<2x32xf32>
    %63 = math.exp %62 : vector<2x32xf32>
    %cst_28 = arith.constant 1.000000e+00 : f32
    %64 = vector.broadcast %cst_28 : f32 to vector<2x32xf32>
    %65 = arith.addf %64, %63 : vector<2x32xf32>
    %66 = arith.divf %64, %65 : vector<2x32xf32>
    %67 = vector.extract_strided_slice %54 {offsets = [0, 64], sizes = [2, 32], strides = [1, 1]} : vector<2x128xf32> to vector<2x32xf32>
    %68 = math.tanh %67 : vector<2x32xf32>
    %69 = vector.extract_strided_slice %54 {offsets = [0, 96], sizes = [2, 32], strides = [1, 1]} : vector<2x128xf32> to vector<2x32xf32>
    %70 = arith.negf %69 : vector<2x32xf32>
    %71 = math.exp %70 : vector<2x32xf32>
    %cst_29 = arith.constant 1.000000e+00 : f32
    %72 = vector.broadcast %cst_29 : f32 to vector<2x32xf32>
    %73 = arith.addf %72, %71 : vector<2x32xf32>
    %74 = arith.divf %72, %73 : vector<2x32xf32>
    %75 = arith.mulf %66, %19 : vector<2x32xf32>
    %76 = arith.mulf %60, %68 : vector<2x32xf32>
    %77 = arith.addf %75, %76 : vector<2x32xf32>
    %78 = math.tanh %77 : vector<2x32xf32>
    %79 = arith.mulf %74, %78 : vector<2x32xf32>
    %80 = tpu.concatenate %50, %79 in 1 : vector<2x32xf32>, vector<2x32xf32> -> vector<2x64xf32>
    %cst_30 = arith.constant dense<0.000000e+00> : vector<2x256xf32>
    %81 = tpu.matmul %80, %7, %cst_30 {dimension_numbers = #tpu.dot_dimension_numbers<[1], [0], [0], [1], [0, 0, 1, 1], [], []>} : vector<2x64xf32>, vector<64x256xf32>, vector<2x256xf32> -> vector<2x256xf32>
    %82 = vector.extract_strided_slice %6 {offsets = [0, 1, 0], sizes = [2, 1, 128], strides = [1, 1, 1]} : vector<2x8x128xf32> to vector<2x1x128xf32>
    %83 = vector.shape_cast %82 : vector<2x1x128xf32> to vector<2x128xf32>
    %84 = vector.extract_strided_slice %81 {offsets = [0, 0], sizes = [2, 128], strides = [1, 1]} : vector<2x256xf32> to vector<2x128xf32>
    %85 = arith.addf %83, %84 : vector<2x128xf32>
    %86 = vector.extract_strided_slice %85 {offsets = [0, 0], sizes = [2, 32], strides = [1, 1]} : vector<2x128xf32> to vector<2x32xf32>
    %87 = arith.negf %86 : vector<2x32xf32>
    %88 = math.exp %87 : vector<2x32xf32>
    %cst_31 = arith.constant 1.000000e+00 : f32
    %89 = vector.broadcast %cst_31 : f32 to vector<2x32xf32>
    %90 = arith.addf %89, %88 : vector<2x32xf32>
    %91 = arith.divf %89, %90 : vector<2x32xf32>
    %92 = vector.extract_strided_slice %85 {offsets = [0, 32], sizes = [2, 32], strides = [1, 1]} : vector<2x128xf32> to vector<2x32xf32>
    %93 = arith.negf %92 : vector<2x32xf32>
    %94 = math.exp %93 : vector<2x32xf32>
    %cst_32 = arith.constant 1.000000e+00 : f32
    %95 = vector.broadcast %cst_32 : f32 to vector<2x32xf32>
    %96 = arith.addf %95, %94 : vector<2x32xf32>
    %97 = arith.divf %95, %96 : vector<2x32xf32>
    %98 = vector.extract_strided_slice %85 {offsets = [0, 64], sizes = [2, 32], strides = [1, 1]} : vector<2x128xf32> to vector<2x32xf32>
    %99 = math.tanh %98 : vector<2x32xf32>
    %100 = vector.extract_strided_slice %85 {offsets = [0, 96], sizes = [2, 32], strides = [1, 1]} : vector<2x128xf32> to vector<2x32xf32>
    %101 = arith.negf %100 : vector<2x32xf32>
    %102 = math.exp %101 : vector<2x32xf32>
    %cst_33 = arith.constant 1.000000e+00 : f32
    %103 = vector.broadcast %cst_33 : f32 to vector<2x32xf32>
    %104 = arith.addf %103, %102 : vector<2x32xf32>
    %105 = arith.divf %103, %104 : vector<2x32xf32>
    %106 = arith.mulf %97, %48 : vector<2x32xf32>
    %107 = arith.mulf %91, %99 : vector<2x32xf32>
    %108 = arith.addf %106, %107 : vector<2x32xf32>
    %109 = math.tanh %108 : vector<2x32xf32>
    %110 = arith.mulf %105, %109 : vector<2x32xf32>
    %cst_34 = arith.constant dense<0.000000e+00> : vector<2x128xf32>
    %111 = tpu.matmul %110, %8, %cst_34 {dimension_numbers = #tpu.dot_dimension_numbers<[1], [0], [0], [1], [0, 0, 1, 1], [], []>} : vector<2x32xf32>, vector<32x128xf32>, vector<2x128xf32> -> vector<2x128xf32>
    %112 = vector.extract_strided_slice %81 {offsets = [0, 128], sizes = [2, 128], strides = [1, 1]} : vector<2x256xf32> to vector<2x128xf32>
    %113 = arith.addf %111, %112 : vector<2x128xf32>
    %114 = arith.addf %113, %11 : vector<2x128xf32>
    %115 = vector.extract_strided_slice %114 {offsets = [0, 0], sizes = [2, 32], strides = [1, 1]} : vector<2x128xf32> to vector<2x32xf32>
    %116 = arith.negf %115 : vector<2x32xf32>
    %117 = math.exp %116 : vector<2x32xf32>
    %cst_35 = arith.constant 1.000000e+00 : f32
    %118 = vector.broadcast %cst_35 : f32 to vector<2x32xf32>
    %119 = arith.addf %118, %117 : vector<2x32xf32>
    %120 = arith.divf %118, %119 : vector<2x32xf32>
    %121 = vector.extract_strided_slice %114 {offsets = [0, 32], sizes = [2, 32], strides = [1, 1]} : vector<2x128xf32> to vector<2x32xf32>
    %122 = arith.negf %121 : vector<2x32xf32>
    %123 = math.exp %122 : vector<2x32xf32>
    %cst_36 = arith.constant 1.000000e+00 : f32
    %124 = vector.broadcast %cst_36 : f32 to vector<2x32xf32>
    %125 = arith.addf %124, %123 : vector<2x32xf32>
    %126 = arith.divf %124, %125 : vector<2x32xf32>
    %127 = vector.extract_strided_slice %114 {offsets = [0, 64], sizes = [2, 32], strides = [1, 1]} : vector<2x128xf32> to vector<2x32xf32>
    %128 = math.tanh %127 : vector<2x32xf32>
    %129 = vector.extract_strided_slice %114 {offsets = [0, 96], sizes = [2, 32], strides = [1, 1]} : vector<2x128xf32> to vector<2x32xf32>
    %130 = arith.negf %129 : vector<2x32xf32>
    %131 = math.exp %130 : vector<2x32xf32>
    %cst_37 = arith.constant 1.000000e+00 : f32
    %132 = vector.broadcast %cst_37 : f32 to vector<2x32xf32>
    %133 = arith.addf %132, %131 : vector<2x32xf32>
    %134 = arith.divf %132, %133 : vector<2x32xf32>
    %135 = arith.mulf %126, %77 : vector<2x32xf32>
    %136 = arith.mulf %120, %128 : vector<2x32xf32>
    %137 = arith.addf %135, %136 : vector<2x32xf32>
    %138 = math.tanh %137 : vector<2x32xf32>
    %139 = arith.mulf %134, %138 : vector<2x32xf32>
    %140 = tpu.concatenate %110, %139 in 1 : vector<2x32xf32>, vector<2x32xf32> -> vector<2x64xf32>
    %cst_38 = arith.constant dense<0.000000e+00> : vector<2x256xf32>
    %141 = tpu.matmul %140, %7, %cst_38 {dimension_numbers = #tpu.dot_dimension_numbers<[1], [0], [0], [1], [0, 0, 1, 1], [], []>} : vector<2x64xf32>, vector<64x256xf32>, vector<2x256xf32> -> vector<2x256xf32>
    %142 = vector.extract_strided_slice %6 {offsets = [0, 2, 0], sizes = [2, 1, 128], strides = [1, 1, 1]} : vector<2x8x128xf32> to vector<2x1x128xf32>
    %143 = vector.shape_cast %142 : vector<2x1x128xf32> to vector<2x128xf32>
    %144 = vector.extract_strided_slice %141 {offsets = [0, 0], sizes = [2, 128], strides = [1, 1]} : vector<2x256xf32> to vector<2x128xf32>
    %145 = arith.addf %143, %144 : vector<2x128xf32>
    %146 = vector.extract_strided_slice %145 {offsets = [0, 0], sizes = [2, 32], strides = [1, 1]} : vector<2x128xf32> to vector<2x32xf32>
    %147 = arith.negf %146 : vector<2x32xf32>
    %148 = math.exp %147 : vector<2x32xf32>
    %cst_39 = arith.constant 1.000000e+00 : f32
    %149 = vector.broadcast %cst_39 : f32 to vector<2x32xf32>
    %150 = arith.addf %149, %148 : vector<2x32xf32>
    %151 = arith.divf %149, %150 : vector<2x32xf32>
    %152 = vector.extract_strided_slice %145 {offsets = [0, 32], sizes = [2, 32], strides = [1, 1]} : vector<2x128xf32> to vector<2x32xf32>
    %153 = arith.negf %152 : vector<2x32xf32>
    %154 = math.exp %153 : vector<2x32xf32>
    %cst_40 = arith.constant 1.000000e+00 : f32
    %155 = vector.broadcast %cst_40 : f32 to vector<2x32xf32>
    %156 = arith.addf %155, %154 : vector<2x32xf32>
    %157 = arith.divf %155, %156 : vector<2x32xf32>
    %158 = vector.extract_strided_slice %145 {offsets = [0, 64], sizes = [2, 32], strides = [1, 1]} : vector<2x128xf32> to vector<2x32xf32>
    %159 = math.tanh %158 : vector<2x32xf32>
    %160 = vector.extract_strided_slice %145 {offsets = [0, 96], sizes = [2, 32], strides = [1, 1]} : vector<2x128xf32> to vector<2x32xf32>
    %161 = arith.negf %160 : vector<2x32xf32>
    %162 = math.exp %161 : vector<2x32xf32>
    %cst_41 = arith.constant 1.000000e+00 : f32
    %163 = vector.broadcast %cst_41 : f32 to vector<2x32xf32>
    %164 = arith.addf %163, %162 : vector<2x32xf32>
    %165 = arith.divf %163, %164 : vector<2x32xf32>
    %166 = arith.mulf %157, %108 : vector<2x32xf32>
    %167 = arith.mulf %151, %159 : vector<2x32xf32>
    %168 = arith.addf %166, %167 : vector<2x32xf32>
    %169 = math.tanh %168 : vector<2x32xf32>
    %170 = arith.mulf %165, %169 : vector<2x32xf32>
    %cst_42 = arith.constant dense<0.000000e+00> : vector<2x128xf32>
    %171 = tpu.matmul %170, %8, %cst_42 {dimension_numbers = #tpu.dot_dimension_numbers<[1], [0], [0], [1], [0, 0, 1, 1], [], []>} : vector<2x32xf32>, vector<32x128xf32>, vector<2x128xf32> -> vector<2x128xf32>
    %172 = vector.extract_strided_slice %141 {offsets = [0, 128], sizes = [2, 128], strides = [1, 1]} : vector<2x256xf32> to vector<2x128xf32>
    %173 = arith.addf %171, %172 : vector<2x128xf32>
    %174 = arith.addf %173, %11 : vector<2x128xf32>
    %175 = vector.extract_strided_slice %174 {offsets = [0, 0], sizes = [2, 32], strides = [1, 1]} : vector<2x128xf32> to vector<2x32xf32>
    %176 = arith.negf %175 : vector<2x32xf32>
    %177 = math.exp %176 : vector<2x32xf32>
    %cst_43 = arith.constant 1.000000e+00 : f32
    %178 = vector.broadcast %cst_43 : f32 to vector<2x32xf32>
    %179 = arith.addf %178, %177 : vector<2x32xf32>
    %180 = arith.divf %178, %179 : vector<2x32xf32>
    %181 = vector.extract_strided_slice %174 {offsets = [0, 32], sizes = [2, 32], strides = [1, 1]} : vector<2x128xf32> to vector<2x32xf32>
    %182 = arith.negf %181 : vector<2x32xf32>
    %183 = math.exp %182 : vector<2x32xf32>
    %cst_44 = arith.constant 1.000000e+00 : f32
    %184 = vector.broadcast %cst_44 : f32 to vector<2x32xf32>
    %185 = arith.addf %184, %183 : vector<2x32xf32>
    %186 = arith.divf %184, %185 : vector<2x32xf32>
    %187 = vector.extract_strided_slice %174 {offsets = [0, 64], sizes = [2, 32], strides = [1, 1]} : vector<2x128xf32> to vector<2x32xf32>
    %188 = math.tanh %187 : vector<2x32xf32>
    %189 = vector.extract_strided_slice %174 {offsets = [0, 96], sizes = [2, 32], strides = [1, 1]} : vector<2x128xf32> to vector<2x32xf32>
    %190 = arith.negf %189 : vector<2x32xf32>
    %191 = math.exp %190 : vector<2x32xf32>
    %cst_45 = arith.constant 1.000000e+00 : f32
    %192 = vector.broadcast %cst_45 : f32 to vector<2x32xf32>
    %193 = arith.addf %192, %191 : vector<2x32xf32>
    %194 = arith.divf %192, %193 : vector<2x32xf32>
    %195 = arith.mulf %186, %137 : vector<2x32xf32>
    %196 = arith.mulf %180, %188 : vector<2x32xf32>
    %197 = arith.addf %195, %196 : vector<2x32xf32>
    %198 = math.tanh %197 : vector<2x32xf32>
    %199 = arith.mulf %194, %198 : vector<2x32xf32>
    %200 = tpu.concatenate %170, %199 in 1 : vector<2x32xf32>, vector<2x32xf32> -> vector<2x64xf32>
    %cst_46 = arith.constant dense<0.000000e+00> : vector<2x256xf32>
    %201 = tpu.matmul %200, %7, %cst_46 {dimension_numbers = #tpu.dot_dimension_numbers<[1], [0], [0], [1], [0, 0, 1, 1], [], []>} : vector<2x64xf32>, vector<64x256xf32>, vector<2x256xf32> -> vector<2x256xf32>
    %202 = vector.extract_strided_slice %6 {offsets = [0, 3, 0], sizes = [2, 1, 128], strides = [1, 1, 1]} : vector<2x8x128xf32> to vector<2x1x128xf32>
    %203 = vector.shape_cast %202 : vector<2x1x128xf32> to vector<2x128xf32>
    %204 = vector.extract_strided_slice %201 {offsets = [0, 0], sizes = [2, 128], strides = [1, 1]} : vector<2x256xf32> to vector<2x128xf32>
    %205 = arith.addf %203, %204 : vector<2x128xf32>
    %206 = vector.extract_strided_slice %205 {offsets = [0, 0], sizes = [2, 32], strides = [1, 1]} : vector<2x128xf32> to vector<2x32xf32>
    %207 = arith.negf %206 : vector<2x32xf32>
    %208 = math.exp %207 : vector<2x32xf32>
    %cst_47 = arith.constant 1.000000e+00 : f32
    %209 = vector.broadcast %cst_47 : f32 to vector<2x32xf32>
    %210 = arith.addf %209, %208 : vector<2x32xf32>
    %211 = arith.divf %209, %210 : vector<2x32xf32>
    %212 = vector.extract_strided_slice %205 {offsets = [0, 32], sizes = [2, 32], strides = [1, 1]} : vector<2x128xf32> to vector<2x32xf32>
    %213 = arith.negf %212 : vector<2x32xf32>
    %214 = math.exp %213 : vector<2x32xf32>
    %cst_48 = arith.constant 1.000000e+00 : f32
    %215 = vector.broadcast %cst_48 : f32 to vector<2x32xf32>
    %216 = arith.addf %215, %214 : vector<2x32xf32>
    %217 = arith.divf %215, %216 : vector<2x32xf32>
    %218 = vector.extract_strided_slice %205 {offsets = [0, 64], sizes = [2, 32], strides = [1, 1]} : vector<2x128xf32> to vector<2x32xf32>
    %219 = math.tanh %218 : vector<2x32xf32>
    %220 = vector.extract_strided_slice %205 {offsets = [0, 96], sizes = [2, 32], strides = [1, 1]} : vector<2x128xf32> to vector<2x32xf32>
    %221 = arith.negf %220 : vector<2x32xf32>
    %222 = math.exp %221 : vector<2x32xf32>
    %cst_49 = arith.constant 1.000000e+00 : f32
    %223 = vector.broadcast %cst_49 : f32 to vector<2x32xf32>
    %224 = arith.addf %223, %222 : vector<2x32xf32>
    %225 = arith.divf %223, %224 : vector<2x32xf32>
    %226 = arith.mulf %217, %168 : vector<2x32xf32>
    %227 = arith.mulf %211, %219 : vector<2x32xf32>
    %228 = arith.addf %226, %227 : vector<2x32xf32>
    %229 = math.tanh %228 : vector<2x32xf32>
    %230 = arith.mulf %225, %229 : vector<2x32xf32>
    %cst_50 = arith.constant dense<0.000000e+00> : vector<2x128xf32>
    %231 = tpu.matmul %230, %8, %cst_50 {dimension_numbers = #tpu.dot_dimension_numbers<[1], [0], [0], [1], [0, 0, 1, 1], [], []>} : vector<2x32xf32>, vector<32x128xf32>, vector<2x128xf32> -> vector<2x128xf32>
    %232 = vector.extract_strided_slice %201 {offsets = [0, 128], sizes = [2, 128], strides = [1, 1]} : vector<2x256xf32> to vector<2x128xf32>
    %233 = arith.addf %231, %232 : vector<2x128xf32>
    %234 = arith.addf %233, %11 : vector<2x128xf32>
    %235 = vector.extract_strided_slice %234 {offsets = [0, 0], sizes = [2, 32], strides = [1, 1]} : vector<2x128xf32> to vector<2x32xf32>
    %236 = arith.negf %235 : vector<2x32xf32>
    %237 = math.exp %236 : vector<2x32xf32>
    %cst_51 = arith.constant 1.000000e+00 : f32
    %238 = vector.broadcast %cst_51 : f32 to vector<2x32xf32>
    %239 = arith.addf %238, %237 : vector<2x32xf32>
    %240 = arith.divf %238, %239 : vector<2x32xf32>
    %241 = vector.extract_strided_slice %234 {offsets = [0, 32], sizes = [2, 32], strides = [1, 1]} : vector<2x128xf32> to vector<2x32xf32>
    %242 = arith.negf %241 : vector<2x32xf32>
    %243 = math.exp %242 : vector<2x32xf32>
    %cst_52 = arith.constant 1.000000e+00 : f32
    %244 = vector.broadcast %cst_52 : f32 to vector<2x32xf32>
    %245 = arith.addf %244, %243 : vector<2x32xf32>
    %246 = arith.divf %244, %245 : vector<2x32xf32>
    %247 = vector.extract_strided_slice %234 {offsets = [0, 64], sizes = [2, 32], strides = [1, 1]} : vector<2x128xf32> to vector<2x32xf32>
    %248 = math.tanh %247 : vector<2x32xf32>
    %249 = vector.extract_strided_slice %234 {offsets = [0, 96], sizes = [2, 32], strides = [1, 1]} : vector<2x128xf32> to vector<2x32xf32>
    %250 = arith.negf %249 : vector<2x32xf32>
    %251 = math.exp %250 : vector<2x32xf32>
    %cst_53 = arith.constant 1.000000e+00 : f32
    %252 = vector.broadcast %cst_53 : f32 to vector<2x32xf32>
    %253 = arith.addf %252, %251 : vector<2x32xf32>
    %254 = arith.divf %252, %253 : vector<2x32xf32>
    %255 = arith.mulf %246, %197 : vector<2x32xf32>
    %256 = arith.mulf %240, %248 : vector<2x32xf32>
    %257 = arith.addf %255, %256 : vector<2x32xf32>
    %258 = math.tanh %257 : vector<2x32xf32>
    %259 = arith.mulf %254, %258 : vector<2x32xf32>
    %260 = tpu.concatenate %230, %259 in 1 : vector<2x32xf32>, vector<2x32xf32> -> vector<2x64xf32>
    %cst_54 = arith.constant dense<0.000000e+00> : vector<2x256xf32>
    %261 = tpu.matmul %260, %7, %cst_54 {dimension_numbers = #tpu.dot_dimension_numbers<[1], [0], [0], [1], [0, 0, 1, 1], [], []>} : vector<2x64xf32>, vector<64x256xf32>, vector<2x256xf32> -> vector<2x256xf32>
    %262 = vector.extract_strided_slice %6 {offsets = [0, 4, 0], sizes = [2, 1, 128], strides = [1, 1, 1]} : vector<2x8x128xf32> to vector<2x1x128xf32>
    %263 = vector.shape_cast %262 : vector<2x1x128xf32> to vector<2x128xf32>
    %264 = vector.extract_strided_slice %261 {offsets = [0, 0], sizes = [2, 128], strides = [1, 1]} : vector<2x256xf32> to vector<2x128xf32>
    %265 = arith.addf %263, %264 : vector<2x128xf32>
    %266 = vector.extract_strided_slice %265 {offsets = [0, 0], sizes = [2, 32], strides = [1, 1]} : vector<2x128xf32> to vector<2x32xf32>
    %267 = arith.negf %266 : vector<2x32xf32>
    %268 = math.exp %267 : vector<2x32xf32>
    %cst_55 = arith.constant 1.000000e+00 : f32
    %269 = vector.broadcast %cst_55 : f32 to vector<2x32xf32>
    %270 = arith.addf %269, %268 : vector<2x32xf32>
    %271 = arith.divf %269, %270 : vector<2x32xf32>
    %272 = vector.extract_strided_slice %265 {offsets = [0, 32], sizes = [2, 32], strides = [1, 1]} : vector<2x128xf32> to vector<2x32xf32>
    %273 = arith.negf %272 : vector<2x32xf32>
    %274 = math.exp %273 : vector<2x32xf32>
    %cst_56 = arith.constant 1.000000e+00 : f32
    %275 = vector.broadcast %cst_56 : f32 to vector<2x32xf32>
    %276 = arith.addf %275, %274 : vector<2x32xf32>
    %277 = arith.divf %275, %276 : vector<2x32xf32>
    %278 = vector.extract_strided_slice %265 {offsets = [0, 64], sizes = [2, 32], strides = [1, 1]} : vector<2x128xf32> to vector<2x32xf32>
    %279 = math.tanh %278 : vector<2x32xf32>
    %280 = vector.extract_strided_slice %265 {offsets = [0, 96], sizes = [2, 32], strides = [1, 1]} : vector<2x128xf32> to vector<2x32xf32>
    %281 = arith.negf %280 : vector<2x32xf32>
    %282 = math.exp %281 : vector<2x32xf32>
    %cst_57 = arith.constant 1.000000e+00 : f32
    %283 = vector.broadcast %cst_57 : f32 to vector<2x32xf32>
    %284 = arith.addf %283, %282 : vector<2x32xf32>
    %285 = arith.divf %283, %284 : vector<2x32xf32>
    %286 = arith.mulf %277, %228 : vector<2x32xf32>
    %287 = arith.mulf %271, %279 : vector<2x32xf32>
    %288 = arith.addf %286, %287 : vector<2x32xf32>
    %289 = math.tanh %288 : vector<2x32xf32>
    %290 = arith.mulf %285, %289 : vector<2x32xf32>
    %cst_58 = arith.constant dense<0.000000e+00> : vector<2x128xf32>
    %291 = tpu.matmul %290, %8, %cst_58 {dimension_numbers = #tpu.dot_dimension_numbers<[1], [0], [0], [1], [0, 0, 1, 1], [], []>} : vector<2x32xf32>, vector<32x128xf32>, vector<2x128xf32> -> vector<2x128xf32>
    %292 = vector.extract_strided_slice %261 {offsets = [0, 128], sizes = [2, 128], strides = [1, 1]} : vector<2x256xf32> to vector<2x128xf32>
    %293 = arith.addf %291, %292 : vector<2x128xf32>
    %294 = arith.addf %293, %11 : vector<2x128xf32>
    %295 = vector.extract_strided_slice %294 {offsets = [0, 0], sizes = [2, 32], strides = [1, 1]} : vector<2x128xf32> to vector<2x32xf32>
    %296 = arith.negf %295 : vector<2x32xf32>
    %297 = math.exp %296 : vector<2x32xf32>
    %cst_59 = arith.constant 1.000000e+00 : f32
    %298 = vector.broadcast %cst_59 : f32 to vector<2x32xf32>
    %299 = arith.addf %298, %297 : vector<2x32xf32>
    %300 = arith.divf %298, %299 : vector<2x32xf32>
    %301 = vector.extract_strided_slice %294 {offsets = [0, 32], sizes = [2, 32], strides = [1, 1]} : vector<2x128xf32> to vector<2x32xf32>
    %302 = arith.negf %301 : vector<2x32xf32>
    %303 = math.exp %302 : vector<2x32xf32>
    %cst_60 = arith.constant 1.000000e+00 : f32
    %304 = vector.broadcast %cst_60 : f32 to vector<2x32xf32>
    %305 = arith.addf %304, %303 : vector<2x32xf32>
    %306 = arith.divf %304, %305 : vector<2x32xf32>
    %307 = vector.extract_strided_slice %294 {offsets = [0, 64], sizes = [2, 32], strides = [1, 1]} : vector<2x128xf32> to vector<2x32xf32>
    %308 = math.tanh %307 : vector<2x32xf32>
    %309 = vector.extract_strided_slice %294 {offsets = [0, 96], sizes = [2, 32], strides = [1, 1]} : vector<2x128xf32> to vector<2x32xf32>
    %310 = arith.negf %309 : vector<2x32xf32>
    %311 = math.exp %310 : vector<2x32xf32>
    %cst_61 = arith.constant 1.000000e+00 : f32
    %312 = vector.broadcast %cst_61 : f32 to vector<2x32xf32>
    %313 = arith.addf %312, %311 : vector<2x32xf32>
    %314 = arith.divf %312, %313 : vector<2x32xf32>
    %315 = arith.mulf %306, %257 : vector<2x32xf32>
    %316 = arith.mulf %300, %308 : vector<2x32xf32>
    %317 = arith.addf %315, %316 : vector<2x32xf32>
    %318 = math.tanh %317 : vector<2x32xf32>
    %319 = arith.mulf %314, %318 : vector<2x32xf32>
    %320 = tpu.concatenate %290, %319 in 1 : vector<2x32xf32>, vector<2x32xf32> -> vector<2x64xf32>
    %cst_62 = arith.constant dense<0.000000e+00> : vector<2x256xf32>
    %321 = tpu.matmul %320, %7, %cst_62 {dimension_numbers = #tpu.dot_dimension_numbers<[1], [0], [0], [1], [0, 0, 1, 1], [], []>} : vector<2x64xf32>, vector<64x256xf32>, vector<2x256xf32> -> vector<2x256xf32>
    %322 = vector.extract_strided_slice %6 {offsets = [0, 5, 0], sizes = [2, 1, 128], strides = [1, 1, 1]} : vector<2x8x128xf32> to vector<2x1x128xf32>
    %323 = vector.shape_cast %322 : vector<2x1x128xf32> to vector<2x128xf32>
    %324 = vector.extract_strided_slice %321 {offsets = [0, 0], sizes = [2, 128], strides = [1, 1]} : vector<2x256xf32> to vector<2x128xf32>
    %325 = arith.addf %323, %324 : vector<2x128xf32>
    %326 = vector.extract_strided_slice %325 {offsets = [0, 0], sizes = [2, 32], strides = [1, 1]} : vector<2x128xf32> to vector<2x32xf32>
    %327 = arith.negf %326 : vector<2x32xf32>
    %328 = math.exp %327 : vector<2x32xf32>
    %cst_63 = arith.constant 1.000000e+00 : f32
    %329 = vector.broadcast %cst_63 : f32 to vector<2x32xf32>
    %330 = arith.addf %329, %328 : vector<2x32xf32>
    %331 = arith.divf %329, %330 : vector<2x32xf32>
    %332 = vector.extract_strided_slice %325 {offsets = [0, 32], sizes = [2, 32], strides = [1, 1]} : vector<2x128xf32> to vector<2x32xf32>
    %333 = arith.negf %332 : vector<2x32xf32>
    %334 = math.exp %333 : vector<2x32xf32>
    %cst_64 = arith.constant 1.000000e+00 : f32
    %335 = vector.broadcast %cst_64 : f32 to vector<2x32xf32>
    %336 = arith.addf %335, %334 : vector<2x32xf32>
    %337 = arith.divf %335, %336 : vector<2x32xf32>
    %338 = vector.extract_strided_slice %325 {offsets = [0, 64], sizes = [2, 32], strides = [1, 1]} : vector<2x128xf32> to vector<2x32xf32>
    %339 = math.tanh %338 : vector<2x32xf32>
    %340 = vector.extract_strided_slice %325 {offsets = [0, 96], sizes = [2, 32], strides = [1, 1]} : vector<2x128xf32> to vector<2x32xf32>
    %341 = arith.negf %340 : vector<2x32xf32>
    %342 = math.exp %341 : vector<2x32xf32>
    %cst_65 = arith.constant 1.000000e+00 : f32
    %343 = vector.broadcast %cst_65 : f32 to vector<2x32xf32>
    %344 = arith.addf %343, %342 : vector<2x32xf32>
    %345 = arith.divf %343, %344 : vector<2x32xf32>
    %346 = arith.mulf %337, %288 : vector<2x32xf32>
    %347 = arith.mulf %331, %339 : vector<2x32xf32>
    %348 = arith.addf %346, %347 : vector<2x32xf32>
    %349 = math.tanh %348 : vector<2x32xf32>
    %350 = arith.mulf %345, %349 : vector<2x32xf32>
    %cst_66 = arith.constant dense<0.000000e+00> : vector<2x128xf32>
    %351 = tpu.matmul %350, %8, %cst_66 {dimension_numbers = #tpu.dot_dimension_numbers<[1], [0], [0], [1], [0, 0, 1, 1], [], []>} : vector<2x32xf32>, vector<32x128xf32>, vector<2x128xf32> -> vector<2x128xf32>
    %352 = vector.extract_strided_slice %321 {offsets = [0, 128], sizes = [2, 128], strides = [1, 1]} : vector<2x256xf32> to vector<2x128xf32>
    %353 = arith.addf %351, %352 : vector<2x128xf32>
    %354 = arith.addf %353, %11 : vector<2x128xf32>
    %355 = vector.extract_strided_slice %354 {offsets = [0, 0], sizes = [2, 32], strides = [1, 1]} : vector<2x128xf32> to vector<2x32xf32>
    %356 = arith.negf %355 : vector<2x32xf32>
    %357 = math.exp %356 : vector<2x32xf32>
    %cst_67 = arith.constant 1.000000e+00 : f32
    %358 = vector.broadcast %cst_67 : f32 to vector<2x32xf32>
    %359 = arith.addf %358, %357 : vector<2x32xf32>
    %360 = arith.divf %358, %359 : vector<2x32xf32>
    %361 = vector.extract_strided_slice %354 {offsets = [0, 32], sizes = [2, 32], strides = [1, 1]} : vector<2x128xf32> to vector<2x32xf32>
    %362 = arith.negf %361 : vector<2x32xf32>
    %363 = math.exp %362 : vector<2x32xf32>
    %cst_68 = arith.constant 1.000000e+00 : f32
    %364 = vector.broadcast %cst_68 : f32 to vector<2x32xf32>
    %365 = arith.addf %364, %363 : vector<2x32xf32>
    %366 = arith.divf %364, %365 : vector<2x32xf32>
    %367 = vector.extract_strided_slice %354 {offsets = [0, 64], sizes = [2, 32], strides = [1, 1]} : vector<2x128xf32> to vector<2x32xf32>
    %368 = math.tanh %367 : vector<2x32xf32>
    %369 = vector.extract_strided_slice %354 {offsets = [0, 96], sizes = [2, 32], strides = [1, 1]} : vector<2x128xf32> to vector<2x32xf32>
    %370 = arith.negf %369 : vector<2x32xf32>
    %371 = math.exp %370 : vector<2x32xf32>
    %cst_69 = arith.constant 1.000000e+00 : f32
    %372 = vector.broadcast %cst_69 : f32 to vector<2x32xf32>
    %373 = arith.addf %372, %371 : vector<2x32xf32>
    %374 = arith.divf %372, %373 : vector<2x32xf32>
    %375 = arith.mulf %366, %317 : vector<2x32xf32>
    %376 = arith.mulf %360, %368 : vector<2x32xf32>
    %377 = arith.addf %375, %376 : vector<2x32xf32>
    %378 = math.tanh %377 : vector<2x32xf32>
    %379 = arith.mulf %374, %378 : vector<2x32xf32>
    %380 = tpu.concatenate %350, %379 in 1 : vector<2x32xf32>, vector<2x32xf32> -> vector<2x64xf32>
    %cst_70 = arith.constant dense<0.000000e+00> : vector<2x256xf32>
    %381 = tpu.matmul %380, %7, %cst_70 {dimension_numbers = #tpu.dot_dimension_numbers<[1], [0], [0], [1], [0, 0, 1, 1], [], []>} : vector<2x64xf32>, vector<64x256xf32>, vector<2x256xf32> -> vector<2x256xf32>
    %382 = vector.extract_strided_slice %6 {offsets = [0, 6, 0], sizes = [2, 1, 128], strides = [1, 1, 1]} : vector<2x8x128xf32> to vector<2x1x128xf32>
    %383 = vector.shape_cast %382 : vector<2x1x128xf32> to vector<2x128xf32>
    %384 = vector.extract_strided_slice %381 {offsets = [0, 0], sizes = [2, 128], strides = [1, 1]} : vector<2x256xf32> to vector<2x128xf32>
    %385 = arith.addf %383, %384 : vector<2x128xf32>
    %386 = vector.extract_strided_slice %385 {offsets = [0, 0], sizes = [2, 32], strides = [1, 1]} : vector<2x128xf32> to vector<2x32xf32>
    %387 = arith.negf %386 : vector<2x32xf32>
    %388 = math.exp %387 : vector<2x32xf32>
    %cst_71 = arith.constant 1.000000e+00 : f32
    %389 = vector.broadcast %cst_71 : f32 to vector<2x32xf32>
    %390 = arith.addf %389, %388 : vector<2x32xf32>
    %391 = arith.divf %389, %390 : vector<2x32xf32>
    %392 = vector.extract_strided_slice %385 {offsets = [0, 32], sizes = [2, 32], strides = [1, 1]} : vector<2x128xf32> to vector<2x32xf32>
    %393 = arith.negf %392 : vector<2x32xf32>
    %394 = math.exp %393 : vector<2x32xf32>
    %cst_72 = arith.constant 1.000000e+00 : f32
    %395 = vector.broadcast %cst_72 : f32 to vector<2x32xf32>
    %396 = arith.addf %395, %394 : vector<2x32xf32>
    %397 = arith.divf %395, %396 : vector<2x32xf32>
    %398 = vector.extract_strided_slice %385 {offsets = [0, 64], sizes = [2, 32], strides = [1, 1]} : vector<2x128xf32> to vector<2x32xf32>
    %399 = math.tanh %398 : vector<2x32xf32>
    %400 = vector.extract_strided_slice %385 {offsets = [0, 96], sizes = [2, 32], strides = [1, 1]} : vector<2x128xf32> to vector<2x32xf32>
    %401 = arith.negf %400 : vector<2x32xf32>
    %402 = math.exp %401 : vector<2x32xf32>
    %cst_73 = arith.constant 1.000000e+00 : f32
    %403 = vector.broadcast %cst_73 : f32 to vector<2x32xf32>
    %404 = arith.addf %403, %402 : vector<2x32xf32>
    %405 = arith.divf %403, %404 : vector<2x32xf32>
    %406 = arith.mulf %397, %348 : vector<2x32xf32>
    %407 = arith.mulf %391, %399 : vector<2x32xf32>
    %408 = arith.addf %406, %407 : vector<2x32xf32>
    %409 = math.tanh %408 : vector<2x32xf32>
    %410 = arith.mulf %405, %409 : vector<2x32xf32>
    %cst_74 = arith.constant dense<0.000000e+00> : vector<2x128xf32>
    %411 = tpu.matmul %410, %8, %cst_74 {dimension_numbers = #tpu.dot_dimension_numbers<[1], [0], [0], [1], [0, 0, 1, 1], [], []>} : vector<2x32xf32>, vector<32x128xf32>, vector<2x128xf32> -> vector<2x128xf32>
    %412 = vector.extract_strided_slice %381 {offsets = [0, 128], sizes = [2, 128], strides = [1, 1]} : vector<2x256xf32> to vector<2x128xf32>
    %413 = arith.addf %411, %412 : vector<2x128xf32>
    %414 = arith.addf %413, %11 : vector<2x128xf32>
    %415 = vector.extract_strided_slice %414 {offsets = [0, 0], sizes = [2, 32], strides = [1, 1]} : vector<2x128xf32> to vector<2x32xf32>
    %416 = arith.negf %415 : vector<2x32xf32>
    %417 = math.exp %416 : vector<2x32xf32>
    %cst_75 = arith.constant 1.000000e+00 : f32
    %418 = vector.broadcast %cst_75 : f32 to vector<2x32xf32>
    %419 = arith.addf %418, %417 : vector<2x32xf32>
    %420 = arith.divf %418, %419 : vector<2x32xf32>
    %421 = vector.extract_strided_slice %414 {offsets = [0, 32], sizes = [2, 32], strides = [1, 1]} : vector<2x128xf32> to vector<2x32xf32>
    %422 = arith.negf %421 : vector<2x32xf32>
    %423 = math.exp %422 : vector<2x32xf32>
    %cst_76 = arith.constant 1.000000e+00 : f32
    %424 = vector.broadcast %cst_76 : f32 to vector<2x32xf32>
    %425 = arith.addf %424, %423 : vector<2x32xf32>
    %426 = arith.divf %424, %425 : vector<2x32xf32>
    %427 = vector.extract_strided_slice %414 {offsets = [0, 64], sizes = [2, 32], strides = [1, 1]} : vector<2x128xf32> to vector<2x32xf32>
    %428 = math.tanh %427 : vector<2x32xf32>
    %429 = vector.extract_strided_slice %414 {offsets = [0, 96], sizes = [2, 32], strides = [1, 1]} : vector<2x128xf32> to vector<2x32xf32>
    %430 = arith.negf %429 : vector<2x32xf32>
    %431 = math.exp %430 : vector<2x32xf32>
    %cst_77 = arith.constant 1.000000e+00 : f32
    %432 = vector.broadcast %cst_77 : f32 to vector<2x32xf32>
    %433 = arith.addf %432, %431 : vector<2x32xf32>
    %434 = arith.divf %432, %433 : vector<2x32xf32>
    %435 = arith.mulf %426, %377 : vector<2x32xf32>
    %436 = arith.mulf %420, %428 : vector<2x32xf32>
    %437 = arith.addf %435, %436 : vector<2x32xf32>
    %438 = math.tanh %437 : vector<2x32xf32>
    %439 = arith.mulf %434, %438 : vector<2x32xf32>
    %440 = tpu.concatenate %410, %439 in 1 : vector<2x32xf32>, vector<2x32xf32> -> vector<2x64xf32>
    %cst_78 = arith.constant dense<0.000000e+00> : vector<2x256xf32>
    %441 = tpu.matmul %440, %7, %cst_78 {dimension_numbers = #tpu.dot_dimension_numbers<[1], [0], [0], [1], [0, 0, 1, 1], [], []>} : vector<2x64xf32>, vector<64x256xf32>, vector<2x256xf32> -> vector<2x256xf32>
    %442 = vector.extract_strided_slice %6 {offsets = [0, 7, 0], sizes = [2, 1, 128], strides = [1, 1, 1]} : vector<2x8x128xf32> to vector<2x1x128xf32>
    %443 = vector.shape_cast %442 : vector<2x1x128xf32> to vector<2x128xf32>
    %444 = vector.extract_strided_slice %441 {offsets = [0, 0], sizes = [2, 128], strides = [1, 1]} : vector<2x256xf32> to vector<2x128xf32>
    %445 = arith.addf %443, %444 : vector<2x128xf32>
    %446 = vector.extract_strided_slice %445 {offsets = [0, 0], sizes = [2, 32], strides = [1, 1]} : vector<2x128xf32> to vector<2x32xf32>
    %447 = arith.negf %446 : vector<2x32xf32>
    %448 = math.exp %447 : vector<2x32xf32>
    %cst_79 = arith.constant 1.000000e+00 : f32
    %449 = vector.broadcast %cst_79 : f32 to vector<2x32xf32>
    %450 = arith.addf %449, %448 : vector<2x32xf32>
    %451 = arith.divf %449, %450 : vector<2x32xf32>
    %452 = vector.extract_strided_slice %445 {offsets = [0, 32], sizes = [2, 32], strides = [1, 1]} : vector<2x128xf32> to vector<2x32xf32>
    %453 = arith.negf %452 : vector<2x32xf32>
    %454 = math.exp %453 : vector<2x32xf32>
    %cst_80 = arith.constant 1.000000e+00 : f32
    %455 = vector.broadcast %cst_80 : f32 to vector<2x32xf32>
    %456 = arith.addf %455, %454 : vector<2x32xf32>
    %457 = arith.divf %455, %456 : vector<2x32xf32>
    %458 = vector.extract_strided_slice %445 {offsets = [0, 64], sizes = [2, 32], strides = [1, 1]} : vector<2x128xf32> to vector<2x32xf32>
    %459 = math.tanh %458 : vector<2x32xf32>
    %460 = vector.extract_strided_slice %445 {offsets = [0, 96], sizes = [2, 32], strides = [1, 1]} : vector<2x128xf32> to vector<2x32xf32>
    %461 = arith.negf %460 : vector<2x32xf32>
    %462 = math.exp %461 : vector<2x32xf32>
    %cst_81 = arith.constant 1.000000e+00 : f32
    %463 = vector.broadcast %cst_81 : f32 to vector<2x32xf32>
    %464 = arith.addf %463, %462 : vector<2x32xf32>
    %465 = arith.divf %463, %464 : vector<2x32xf32>
    %466 = arith.mulf %457, %408 : vector<2x32xf32>
    %467 = arith.mulf %451, %459 : vector<2x32xf32>
    %468 = arith.addf %466, %467 : vector<2x32xf32>
    %469 = math.tanh %468 : vector<2x32xf32>
    %470 = arith.mulf %465, %469 : vector<2x32xf32>
    %cst_82 = arith.constant dense<0.000000e+00> : vector<2x128xf32>
    %471 = tpu.matmul %470, %8, %cst_82 {dimension_numbers = #tpu.dot_dimension_numbers<[1], [0], [0], [1], [0, 0, 1, 1], [], []>} : vector<2x32xf32>, vector<32x128xf32>, vector<2x128xf32> -> vector<2x128xf32>
    %472 = vector.extract_strided_slice %441 {offsets = [0, 128], sizes = [2, 128], strides = [1, 1]} : vector<2x256xf32> to vector<2x128xf32>
    %473 = arith.addf %471, %472 : vector<2x128xf32>
    %474 = arith.addf %473, %11 : vector<2x128xf32>
    %475 = vector.extract_strided_slice %474 {offsets = [0, 0], sizes = [2, 32], strides = [1, 1]} : vector<2x128xf32> to vector<2x32xf32>
    %476 = arith.negf %475 : vector<2x32xf32>
    %477 = math.exp %476 : vector<2x32xf32>
    %cst_83 = arith.constant 1.000000e+00 : f32
    %478 = vector.broadcast %cst_83 : f32 to vector<2x32xf32>
    %479 = arith.addf %478, %477 : vector<2x32xf32>
    %480 = arith.divf %478, %479 : vector<2x32xf32>
    %481 = vector.extract_strided_slice %474 {offsets = [0, 32], sizes = [2, 32], strides = [1, 1]} : vector<2x128xf32> to vector<2x32xf32>
    %482 = arith.negf %481 : vector<2x32xf32>
    %483 = math.exp %482 : vector<2x32xf32>
    %cst_84 = arith.constant 1.000000e+00 : f32
    %484 = vector.broadcast %cst_84 : f32 to vector<2x32xf32>
    %485 = arith.addf %484, %483 : vector<2x32xf32>
    %486 = arith.divf %484, %485 : vector<2x32xf32>
    %487 = vector.extract_strided_slice %474 {offsets = [0, 64], sizes = [2, 32], strides = [1, 1]} : vector<2x128xf32> to vector<2x32xf32>
    %488 = math.tanh %487 : vector<2x32xf32>
    %489 = vector.extract_strided_slice %474 {offsets = [0, 96], sizes = [2, 32], strides = [1, 1]} : vector<2x128xf32> to vector<2x32xf32>
    %490 = arith.negf %489 : vector<2x32xf32>
    %491 = math.exp %490 : vector<2x32xf32>
    %cst_85 = arith.constant 1.000000e+00 : f32
    %492 = vector.broadcast %cst_85 : f32 to vector<2x32xf32>
    %493 = arith.addf %492, %491 : vector<2x32xf32>
    %494 = arith.divf %492, %493 : vector<2x32xf32>
    %495 = arith.mulf %486, %437 : vector<2x32xf32>
    %496 = arith.mulf %480, %488 : vector<2x32xf32>
    %497 = arith.addf %495, %496 : vector<2x32xf32>
    %498 = math.tanh %497 : vector<2x32xf32>
    %499 = arith.mulf %494, %498 : vector<2x32xf32>
    %c0_86 = arith.constant 0 : index
    %c0_87 = arith.constant 0 : index
    %c0_88 = arith.constant 0 : index
    %500 = vector.load %arg11[%c0_86, %c0_87, %c0_88] : memref<2x2x32xf32, #tpu.memory_space<vmem>>, vector<1x2x32xf32>
    %501 = vector.shape_cast %500 : vector<1x2x32xf32> to vector<2x32xf32>
    %502 = vector.shape_cast %470 : vector<2x32xf32> to vector<1x2x32xf32>
    tpu.vector_store %arg11[%c0_86, %c0_87, %c0_88], %502 {strides = array<i32>} : memref<2x2x32xf32, #tpu.memory_space<vmem>>, vector<1x2x32xf32>,
    %c1_89 = arith.constant 1 : index
    %c0_90 = arith.constant 0 : index
    %c0_91 = arith.constant 0 : index
    %503 = vector.load %arg11[%c1_89, %c0_90, %c0_91] : memref<2x2x32xf32, #tpu.memory_space<vmem>>, vector<1x2x32xf32>
    %504 = vector.shape_cast %503 : vector<1x2x32xf32> to vector<2x32xf32>
    %505 = vector.shape_cast %499 : vector<2x32xf32> to vector<1x2x32xf32>
    tpu.vector_store %arg11[%c1_89, %c0_90, %c0_91], %505 {strides = array<i32>} : memref<2x2x32xf32, #tpu.memory_space<vmem>>, vector<1x2x32xf32>,
    %c0_92 = arith.constant 0 : index
    %c0_93 = arith.constant 0 : index
    %c0_94 = arith.constant 0 : index
    %506 = vector.load %arg12[%c0_92, %c0_93, %c0_94] : memref<2x2x32xf32, #tpu.memory_space<vmem>>, vector<1x2x32xf32>
    %507 = vector.shape_cast %506 : vector<1x2x32xf32> to vector<2x32xf32>
    %508 = vector.shape_cast %468 : vector<2x32xf32> to vector<1x2x32xf32>
    tpu.vector_store %arg12[%c0_92, %c0_93, %c0_94], %508 {strides = array<i32>} : memref<2x2x32xf32, #tpu.memory_space<vmem>>, vector<1x2x32xf32>,
    %c1_95 = arith.constant 1 : index
    %c0_96 = arith.constant 0 : index
    %c0_97 = arith.constant 0 : index
    %509 = vector.load %arg12[%c1_95, %c0_96, %c0_97] : memref<2x2x32xf32, #tpu.memory_space<vmem>>, vector<1x2x32xf32>
    %510 = vector.shape_cast %509 : vector<1x2x32xf32> to vector<2x32xf32>
    %511 = vector.shape_cast %497 : vector<2x32xf32> to vector<1x2x32xf32>
    tpu.vector_store %arg12[%c1_95, %c0_96, %c0_97], %511 {strides = array<i32>} : memref<2x2x32xf32, #tpu.memory_space<vmem>>, vector<1x2x32xf32>,
    %cst_98 = arith.constant 0.000000e+00 : f32
    %512 = vector.broadcast %cst_98 : f32 to vector<2x32xf32>
    %513 = arith.maximumf %499, %512 : vector<2x32xf32>
    %c0_99 = arith.constant 0 : index
    %c0_100 = arith.constant 0 : index
    %514 = vector.load %arg8[%c0_99, %c0_100] : memref<32x1xf32, #tpu.memory_space<vmem>>, vector<32x1xf32>
    %cst_101 = arith.constant dense<0.000000e+00> : vector<2x1xf32>
    %515 = tpu.matmul %513, %514, %cst_101 {dimension_numbers = #tpu.dot_dimension_numbers<[1], [0], [0], [1], [0, 0, 1, 1], [], []>} : vector<2x32xf32>, vector<32x1xf32>, vector<2x1xf32> -> vector<2x1xf32>
    %c0_102 = arith.constant 0 : index
    %c0_103 = arith.constant 0 : index
    %516 = vector.load %arg9[%c0_102, %c0_103] : memref<1x1xf32, #tpu.memory_space<vmem>>, vector<1x1xf32>
    %517 = vector.broadcast %516 : vector<1x1xf32> to vector<2x1xf32>
    %518 = arith.addf %515, %517 : vector<2x1xf32>
    %c0_104 = arith.constant 0 : index
    %c0_105 = arith.constant 0 : index
    %519 = vector.load %arg10[%c0_104, %c0_105] : memref<2x1xf32, #tpu.memory_space<vmem>>, vector<2x1xf32>
    tpu.vector_store %arg10[%c0_104, %c0_105], %518 {strides = array<i32>} : memref<2x1xf32, #tpu.memory_space<vmem>>, vector<2x1xf32>,
    return
  }
}

</mosaic_0001>

<llo_original>
// kernel: lstm_net_forward.1
$region0: #{lstm_net_forward.1}
  #allocation0 [shape = 'u32[]', space=smem, size = 0x4, offset = 0x4, fixed_abs, tag = 'smem constant byte address 0x4 - core index']
  #allocation1 [shape = 'u32[144,128]{1,0:T(1,128)}', space=vmem, size = 0x12000, scoped, tag = 'internal scratch']
  #allocation2 [shape = 'f32[1,1]{1,0:T(1,128)S(1)}', space=vmem, size = 0x200, scoped, tag = 'scoped memory for lstm_net_forward.1']
  %s0 = inlined_call_operand.vmem [shape: f32[16,5], index: 0, kind: input, shape index: {}]
  %s1 = inlined_call_operand.vmem [shape: f32[2,2,32], index: 1, kind: input, shape index: {}, may-alias: {1,11}]
  %s2 = inlined_call_operand.vmem [shape: f32[2,2,32], index: 2, kind: input, shape index: {}, may-alias: {2,12}]
  %s3 = inlined_call_operand.vmem [shape: f32[5,128], index: 3, kind: input, shape index: {}]
  %s4 = inlined_call_operand.vmem [shape: f32[1,128], index: 4, kind: input, shape index: {}]
  %s5 = inlined_call_operand.vmem [shape: f32[64,256], index: 5, kind: input, shape index: {}]
  %s6 = inlined_call_operand.vmem [shape: f32[32,128], index: 6, kind: input, shape index: {}]
  %s7 = inlined_call_operand.vmem [shape: f32[1,128], index: 7, kind: input, shape index: {}]
  %s8 = inlined_call_operand.vmem [shape: f32[32,1], index: 8, kind: input, shape index: {}]
  %s9 = inlined_call_operand.<no memory space> [shape: f32[1,1], index: 9, kind: input, shape index: {}]
  %s10 = inlined_call_operand.vmem [shape: f32[2,1], index: 10, kind: output, shape index: {0}]
  %s11 = inlined_call_operand.vmem [shape: f32[2,2,32], index: 11, kind: output, shape index: {1}, may-alias: {1,11}]
  %s12 = inlined_call_operand.vmem [shape: f32[2,2,32], index: 12, kind: output, shape index: {2}, may-alias: {2,12}]
  %13 = xla_tuple %s10, %s11, %s12
  %s14 = sld [smem:[#allocation0]]
  $region66: #{lstm_net_forward.1} parent=0
    _
  %s16 = ssub.s32 1, %s14
  %s17 = scalar_select 0, %s16, %s14
  %v18 = vstv %s9
  %19 = vst [vmem:[#allocation2] sm:$0x1] %v18
  // Predicated region
  $region2: #{lstm_net_forward.1} parent=0 // pred_check
    _
  $region3: #{lstm_net_forward.1} parent=0 // pred_check_branch
    %21 = sbr.rel (0) target = $region5
  $region4: #{lstm_net_forward.1} parent=0 // pred_region
    _
  $region5: #{lstm_net_forward.1} parent=0 // pred_fallthru
    _
  // Predicated region
  $region6: #{lstm_net_forward.1} parent=0 // pred_check
    _
  $region7: #{lstm_net_forward.1} parent=0 // pred_check_branch
    %23 = sbr.rel (0) target = $region9
  $region8: #{lstm_net_forward.1} parent=0 // pred_region
    _
  $region9: #{lstm_net_forward.1} parent=0 // pred_fallthru
    _
  // Predicated region
  $region10: #{lstm_net_forward.1} parent=0 // pred_check
    _
  $region11: #{lstm_net_forward.1} parent=0 // pred_check_branch
    %25 = sbr.rel (0) target = $region13
  $region12: #{lstm_net_forward.1} parent=0 // pred_region
    _
  $region13: #{lstm_net_forward.1} parent=0 // pred_fallthru
    _
  // Predicated region
  $region14: #{lstm_net_forward.1} parent=0 // pred_check
    _
  $region15: #{lstm_net_forward.1} parent=0 // pred_check_branch
    %27 = sbr.rel (0) target = $region17
  $region16: #{lstm_net_forward.1} parent=0 // pred_region
    _
  $region17: #{lstm_net_forward.1} parent=0 // pred_fallthru
    _
  // Predicated region
  $region18: #{lstm_net_forward.1} parent=0 // pred_check
    _
  $region19: #{lstm_net_forward.1} parent=0 // pred_check_branch
    %29 = sbr.rel (0) target = $region21
  $region20: #{lstm_net_forward.1} parent=0 // pred_region
    _
  $region21: #{lstm_net_forward.1} parent=0 // pred_fallthru
    _
  // Predicated region
  $region22: #{lstm_net_forward.1} parent=0 // pred_check
    _
  $region23: #{lstm_net_forward.1} parent=0 // pred_check_branch
    %31 = sbr.rel (0) target = $region25
  $region24: #{lstm_net_forward.1} parent=0 // pred_region
    _
  $region25: #{lstm_net_forward.1} parent=0 // pred_fallthru
    _
  // Predicated region
  $region26: #{lstm_net_forward.1} parent=0 // pred_check
    _
  $region27: #{lstm_net_forward.1} parent=0 // pred_check_branch
    %33 = sbr.rel (0) target = $region29
  $region28: #{lstm_net_forward.1} parent=0 // pred_region
    _
  $region29: #{lstm_net_forward.1} parent=0 // pred_fallthru
    _
  // Predicated region
  $region30: #{lstm_net_forward.1} parent=0 // pred_check
    _
  $region31: #{lstm_net_forward.1} parent=0 // pred_check_branch
    %35 = sbr.rel (0) target = $region33
  $region32: #{lstm_net_forward.1} parent=0 // pred_region
    _
  $region33: #{lstm_net_forward.1} parent=0 // pred_fallthru
    _
  // Predicated region
  $region34: #{lstm_net_forward.1} parent=0 // pred_check
    _
  $region35: #{lstm_net_forward.1} parent=0 // pred_check_branch
    %37 = sbr.rel (0) target = $region37
  $region36: #{lstm_net_forward.1} parent=0 // pred_region
    _
  $region37: #{lstm_net_forward.1} parent=0 // pred_fallthru
    _
  // Predicated region
  $region38: #{lstm_net_forward.1} parent=0 // pred_check
    _
  $region39: #{lstm_net_forward.1} parent=0 // pred_check_branch
    %39 = sbr.rel (0) target = $region41
  $region40: #{lstm_net_forward.1} parent=0 // pred_region
    _
  $region41: #{lstm_net_forward.1} parent=0 // pred_fallthru
    _
  %v40 = vld [vmem:[%s0] sm:$0xff]
  %v41 = vld [vmem:[%s0 + $0x8] sm:$0xff]
  %v42 = vld [vmem:[%s3] sm:$0x1f]
  %v43 = vld [vmem:[%s4] sm:$0x1]
  %v45 = vlaneseq
  %v46 = vshrl.u32 %v45, 7
  %v47 = vsub.s32 0, %v46
  %v48 = vrot.slane %v43, %v47
  %vm50 = vcmask 39936
  %v52 = vsel %vm50, %v40, 0
  %v55 = vsel %vm50, %v41, 0
  %vm57 = vcmask 1044480
  %v59 = vsel %vm57, %v42, 0
  %61 = vmatprep.subr.mxu0 0.0
  %62 = vmatpush1.msra.mxu0 0.0
  %63 = vmatprep.subr.mxu0 0.0
  %64 = vmatpush1.msra.mxu0 0.0
  %65 = vmatprep.subr.mxu0 0.0
  %66 = vmatpush1.msra.mxu0 0.0
  %67 = vmatprep.subr.mxu0 0.0
  %68 = vmatpush1.msra.mxu0 0.0
  %69 = vmatprep.subr.mxu0 0.0
  %70 = vmatpush1.msra.mxu0 0.0
  %71 = vmatprep.subr.mxu0 0.0
  %72 = vmatpush1.msra.mxu0 0.0
  %73 = vmatprep.subr.mxu0 0.0
  %74 = vmatpush1.msra.mxu0 0.0
  %75 = vmatprep.subr.mxu0 0.0
  %76 = vmatpush1.msra.mxu0 0.0
  %77 = vmatprep.subr.mxu0 0.0
  %78 = vmatpush1.msra.mxu0 0.0
  %79 = vmatprep.subr.mxu0 0.0
  %80 = vmatpush1.msra.mxu0 0.0
  %81 = vmatprep.subr.mxu0 0.0
  %82 = vmatpush1.msra.mxu0 0.0
  %83 = vmatprep.subr.mxu0 0.0
  %84 = vmatpush1.msra.mxu0 0.0
  %85 = vmatprep.subr.mxu0 0.0
  %86 = vmatpush1.msra.mxu0 0.0
  %87 = vmatprep.subr.mxu0 0.0
  %88 = vmatpush1.msra.mxu0 0.0
  %89 = vmatprep.subr.mxu0 0.0
  %90 = vmatpush1.msra.mxu0 0.0
  %91 = vmatprep.subr.mxu0 0.0
  %92 = vmatpush1.msra.mxu0 %v59
  %93 = vmatprep.subr.mxu0 0.0
  %94 = vmatpush2.msra.mxu0 0.0
  %95 = vmatprep.subr.mxu0 0.0
  %96 = vmatpush2.msra.mxu0 0.0
  %97 = vmatprep.subr.mxu0 0.0
  %98 = vmatpush2.msra.mxu0 0.0
  %99 = vmatprep.subr.mxu0 0.0
  %100 = vmatpush2.msra.mxu0 0.0
  %101 = vmatprep.subr.mxu0 0.0
  %102 = vmatpush2.msra.mxu0 0.0
  %103 = vmatprep.subr.mxu0 0.0
  %104 = vmatpush2.msra.mxu0 0.0
  %105 = vmatprep.subr.mxu0 0.0
  %106 = vmatpush2.msra.mxu0 0.0
  %107 = vmatprep.subr.mxu0 0.0
  %108 = vmatpush2.msra.mxu0 0.0
  %109 = vmatprep.subr.mxu0 0.0
  %110 = vmatpush2.msra.mxu0 0.0
  %111 = vmatprep.subr.mxu0 0.0
  %112 = vmatpush2.msra.mxu0 0.0
  %113 = vmatprep.subr.mxu0 0.0
  %114 = vmatpush2.msra.mxu0 0.0
  %115 = vmatprep.subr.mxu0 0.0
  %116 = vmatpush2.msra.mxu0 0.0
  %117 = vmatprep.subr.mxu0 0.0
  %118 = vmatpush2.msra.mxu0 0.0
  %119 = vmatprep.subr.mxu0 0.0
  %120 = vmatpush2.msra.mxu0 0.0
  %121 = vmatprep.subr.mxu0 0.0
  %122 = vmatpush2.msra.mxu0 0.0
  %123 = vmatprep.subr.mxu0 0.0
  %124 = vmatpush2.msra.mxu0 0.0
  %125 = vmatprep.mubr.f32.mxu0 0.0
  %126 = vmatmul.mubr.f32.gmra.mxu0 %v52
  %v127 = vpop.f32.mrf.mxu0
  %v128 = vadd.f32 %v48, %v127
  %v129 = vpop.f32.mrf.mxu0
  %130 = vmatprep.mubr.f32.mxu0 0.0
  %131 = vmatmul.mubr.f32.gmra.mxu0 %v55
  %v132 = vpop.f32.mrf.mxu0
  %v133 = vadd.f32 %v48, %v132
  %v134 = vpop.f32.mrf.mxu0
  %135 = vdwg.mxu0
  %v136 = vld [vmem:[%s5] sm:$0xff]
  %v137 = vld [vmem:[%s5 + $0x8] sm:$0xff]
  %v138 = vld [vmem:[%s5 + $0x10] sm:$0xff]
  %v139 = vld [vmem:[%s5 + $0x18] sm:$0xff]
  %v140 = vld [vmem:[%s5 + $0x20] sm:$0xff]
  %v141 = vld [vmem:[%s5 + $0x28] sm:$0xff]
  %v142 = vld [vmem:[%s5 + $0x30] sm:$0xff]
  %v143 = vld [vmem:[%s5 + $0x38] sm:$0xff]
  %v144 = vld [vmem:[%s5 + $0x40] sm:$0xff]
  %v145 = vld [vmem:[%s5 + $0x48] sm:$0xff]
  %v146 = vld [vmem:[%s5 + $0x50] sm:$0xff]
  %v147 = vld [vmem:[%s5 + $0x58] sm:$0xff]
  %v148 = vld [vmem:[%s5 + $0x60] sm:$0xff]
  %v149 = vld [vmem:[%s5 + $0x68] sm:$0xff]
  %v150 = vld [vmem:[%s5 + $0x70] sm:$0xff]
  %v151 = vld [vmem:[%s5 + $0x78] sm:$0xff]
  %v152 = vld [vmem:[%s6] sm:$0xff]
  %v153 = vld [vmem:[%s6 + $0x8] sm:$0xff]
  %v154 = vld [vmem:[%s6 + $0x10] sm:$0xff]
  %v155 = vld [vmem:[%s6 + $0x18] sm:$0xff]
  %v156 = vld [vmem:[%s7] sm:$0x1]
  %v158 = vlaneseq
  %v159 = vshrl.u32 %v158, 7
  %v160 = vsub.s32 0, %v159
  %v161 = vrot.slane %v156, %v160
  %v163 = vld [vmem:[%s1] sm:$0x3]
  %v164 = vld [vmem:[%s2] sm:$0x3]
  %s165 = scalar_lea.vmem %s1, 2
  %v166 = vld [vmem:[%s165] sm:$0x3]
  %s167 = scalar_lea.vmem %s2, 2
  %v168 = vld [vmem:[%s167] sm:$0x3]
  %170 = vrot.lane.b32.xlu0 %v166, 32
  %v171 = vpop.permute.xlu0 %170
  %vm173 = vcmask 261120
  %v174 = vsel %vm173, %v163, %v171
  %vm175 = vcmask 523264
  %v177 = vsel %vm175, %v174, 0
  %179 = vmatprep.subr.mxu0 0.0
  %180 = vmatpush1.msra.mxu0 0.0
  %181 = vmatprep.subr.mxu0 0.0
  %182 = vmatpush1.msra.mxu0 0.0
  %183 = vmatprep.subr.mxu0 0.0
  %184 = vmatpush1.msra.mxu0 0.0
  %185 = vmatprep.subr.mxu0 0.0
  %186 = vmatpush1.msra.mxu0 0.0
  %187 = vmatprep.subr.mxu0 0.0
  %188 = vmatpush1.msra.mxu0 0.0
  %189 = vmatprep.subr.mxu0 0.0
  %190 = vmatpush1.msra.mxu0 0.0
  %191 = vmatprep.subr.mxu0 0.0
  %192 = vmatpush1.msra.mxu0 0.0
  %193 = vmatprep.subr.mxu0 0.0
  %194 = vmatpush1.msra.mxu0 0.0
  %195 = vmatprep.subr.mxu0 %v151
  %196 = vmatpush1.msra.mxu0 %v150
  %197 = vmatprep.subr.mxu0 %v149
  %198 = vmatpush1.msra.mxu0 %v148
  %199 = vmatprep.subr.mxu0 %v147
  %200 = vmatpush1.msra.mxu0 %v146
  %201 = vmatprep.subr.mxu0 %v145
  %202 = vmatpush1.msra.mxu0 %v144
  %203 = vmatprep.subr.mxu0 %v143
  %204 = vmatpush1.msra.mxu0 %v142
  %205 = vmatprep.subr.mxu0 %v141
  %206 = vmatpush1.msra.mxu0 %v140
  %207 = vmatprep.subr.mxu0 %v139
  %208 = vmatpush1.msra.mxu0 %v138
  %209 = vmatprep.subr.mxu0 %v137
  %210 = vmatpush1.msra.mxu0 %v136
  %211 = vmatprep.subr.mxu0 0.0
  %212 = vmatpush2.msra.mxu0 0.0
  %213 = vmatprep.subr.mxu0 0.0
  %214 = vmatpush2.msra.mxu0 0.0
  %215 = vmatprep.subr.mxu0 0.0
  %216 = vmatpush2.msra.mxu0 0.0
  %217 = vmatprep.subr.mxu0 0.0
  %218 = vmatpush2.msra.mxu0 0.0
  %219 = vmatprep.subr.mxu0 0.0
  %220 = vmatpush2.msra.mxu0 0.0
  %221 = vmatprep.subr.mxu0 0.0
  %222 = vmatpush2.msra.mxu0 0.0
  %223 = vmatprep.subr.mxu0 0.0
  %224 = vmatpush2.msra.mxu0 0.0
  %225 = vmatprep.subr.mxu0 0.0
  %226 = vmatpush2.msra.mxu0 0.0
  %227 = vmatprep.subr.mxu0 0.0
  %228 = vmatpush2.msra.mxu0 0.0
  %229 = vmatprep.subr.mxu0 0.0
  %230 = vmatpush2.msra.mxu0 0.0
  %231 = vmatprep.subr.mxu0 0.0
  %232 = vmatpush2.msra.mxu0 0.0
  %233 = vmatprep.subr.mxu0 0.0
  %234 = vmatpush2.msra.mxu0 0.0
  %235 = vmatprep.subr.mxu0 0.0
  %236 = vmatpush2.msra.mxu0 0.0
  %237 = vmatprep.subr.mxu0 0.0
  %238 = vmatpush2.msra.mxu0 0.0
  %239 = vmatprep.subr.mxu0 0.0
  %240 = vmatpush2.msra.mxu0 0.0
  %241 = vmatprep.subr.mxu0 0.0
  %242 = vmatpush2.msra.mxu0 0.0
  %243 = vmatprep.mubr.f32.mxu0 0.0
  %244 = vmatmul.mubr.f32.gmra.mxu0 %v177
  %v245 = vpop.f32.mrf.mxu0
  %v246 = vadd.f32 0.0, %v245
  %v247 = vpop.f32.mrf.mxu0
  %v248 = vadd.f32 0.0, %v247
  %249 = vdwg.mxu0
  %v251 = vrot.slane %v246, 1
  %v254 = vadd.f32 %v128, %v246
  %v255 = vadd.f32 %v133, %v251
  %v256 = vxor.u32 %v254, 2147483648
  %v257 = vxor.u32 %v255, 2147483648
  %v258 = vmul.f32 %v256, 1.442695
  %v259 = vpow.pop %v258
  %v260 = vmul.f32 %v257, 1.442695
  %v261 = vpow.pop %v260
  %v262 = vadd.f32 %v259, 1.0
  %v263 = vadd.f32 %v261, 1.0
  %v264 = vrcp.pop %v262
  %v265 = vmul.f32 1.0, %v264
  %v266 = vrcp.pop %v263
  %v267 = vmul.f32 1.0, %v266
  %v268 = vtanh.pop %v254
  %v269 = vtanh.pop %v255
  %v271 = vrot.slane %v164, 1
  %272 = vrot.lane.b32.xlu0 %v164, 32
  %v273 = vpop.permute.xlu0 %272
  %274 = vrot.lane.b32.xlu0 %v271, 32
  %v275 = vpop.permute.xlu0 %274
  %v278 = vmul.f32 %v265, %v273
  %v279 = vmul.f32 %v267, %v275
  %282 = vrot.lane.b32.xlu0 %v268, 64
  %v283 = vpop.permute.xlu0 %282
  %284 = vrot.lane.b32.xlu0 %v269, 64
  %v285 = vpop.permute.xlu0 %284
  %v288 = vmul.f32 %v265, %v283
  %v289 = vmul.f32 %v267, %v285
  %292 = vrot.lane.b32.xlu0 %v288, 32
  %v293 = vpop.permute.xlu0 %292
  %294 = vrot.lane.b32.xlu0 %v289, 32
  %v295 = vpop.permute.xlu0 %294
  %v298 = vadd.f32 %v278, %v293
  %v299 = vadd.f32 %v279, %v295
  %v300 = vtanh.pop %v298
  %v301 = vtanh.pop %v299
  %304 = vrot.lane.b32.xlu0 %v300, 64
  %v305 = vpop.permute.xlu0 %304
  %306 = vrot.lane.b32.xlu0 %v301, 64
  %v307 = vpop.permute.xlu0 %306
  %v310 = vmul.f32 %v265, %v305
  %v311 = vmul.f32 %v267, %v307
  %v314 = vrot.slane %v311, 7
  %vm315 = vcmask 1041409
  %v316 = vsel %vm315, %v314, %v310
  %317 = vrot.lane.b32.xlu0 %v316, 32
  %v318 = vpop.permute.xlu0 %317
  %v319 = vsel %vm173, %v318, 0
  %321 = vmatprep.subr.mxu0 0.0
  %322 = vmatpush1.msra.mxu0 0.0
  %323 = vmatprep.subr.mxu0 0.0
  %324 = vmatpush1.msra.mxu0 0.0
  %325 = vmatprep.subr.mxu0 0.0
  %326 = vmatpush1.msra.mxu0 0.0
  %327 = vmatprep.subr.mxu0 0.0
  %328 = vmatpush1.msra.mxu0 0.0
  %329 = vmatprep.subr.mxu0 0.0
  %330 = vmatpush1.msra.mxu0 0.0
  %331 = vmatprep.subr.mxu0 0.0
  %332 = vmatpush1.msra.mxu0 0.0
  %333 = vmatprep.subr.mxu0 0.0
  %334 = vmatpush1.msra.mxu0 0.0
  %335 = vmatprep.subr.mxu0 0.0
  %336 = vmatpush1.msra.mxu0 0.0
  %337 = vmatprep.subr.mxu0 0.0
  %338 = vmatpush1.msra.mxu0 0.0
  %339 = vmatprep.subr.mxu0 0.0
  %340 = vmatpush1.msra.mxu0 0.0
  %341 = vmatprep.subr.mxu0 0.0
  %342 = vmatpush1.msra.mxu0 0.0
  %343 = vmatprep.subr.mxu0 0.0
  %344 = vmatpush1.msra.mxu0 0.0
  %345 = vmatprep.subr.mxu0 0.0
  %346 = vmatpush1.msra.mxu0 %v155
  %347 = vmatprep.subr.mxu0 0.0
  %348 = vmatpush1.msra.mxu0 %v154
  %349 = vmatprep.subr.mxu0 0.0
  %350 = vmatpush1.msra.mxu0 %v153
  %351 = vmatprep.subr.mxu0 0.0
  %352 = vmatpush1.msra.mxu0 %v152
  %353 = vmatprep.subr.mxu0 0.0
  %354 = vmatpush2.msra.mxu0 0.0
  %355 = vmatprep.subr.mxu0 0.0
  %356 = vmatpush2.msra.mxu0 0.0
  %357 = vmatprep.subr.mxu0 0.0
  %358 = vmatpush2.msra.mxu0 0.0
  %359 = vmatprep.subr.mxu0 0.0
  %360 = vmatpush2.msra.mxu0 0.0
  %361 = vmatprep.subr.mxu0 0.0
  %362 = vmatpush2.msra.mxu0 0.0
  %363 = vmatprep.subr.mxu0 0.0
  %364 = vmatpush2.msra.mxu0 0.0
  %365 = vmatprep.subr.mxu0 0.0
  %366 = vmatpush2.msra.mxu0 0.0
  %367 = vmatprep.subr.mxu0 0.0
  %368 = vmatpush2.msra.mxu0 0.0
  %369 = vmatprep.subr.mxu0 0.0
  %370 = vmatpush2.msra.mxu0 0.0
  %371 = vmatprep.subr.mxu0 0.0
  %372 = vmatpush2.msra.mxu0 0.0
  %373 = vmatprep.subr.mxu0 0.0
  %374 = vmatpush2.msra.mxu0 0.0
  %375 = vmatprep.subr.mxu0 0.0
  %376 = vmatpush2.msra.mxu0 0.0
  %377 = vmatprep.subr.mxu0 0.0
  %378 = vmatpush2.msra.mxu0 0.0
  %379 = vmatprep.subr.mxu0 0.0
  %380 = vmatpush2.msra.mxu0 0.0
  %381 = vmatprep.subr.mxu0 0.0
  %382 = vmatpush2.msra.mxu0 0.0
  %383 = vmatprep.subr.mxu0 0.0
  %384 = vmatpush2.msra.mxu0 0.0
  %385 = vmatprep.mubr.f32.mxu0 0.0
  %386 = vmatmul.mubr.f32.gmra.mxu0 %v319
  %v387 = vpop.f32.mrf.mxu0
  %v388 = vadd.f32 %v248, %v387
  %v389 = vpop.f32.mrf.mxu0
  %390 = vdwg.mxu0
  %v391 = vadd.f32 %v388, %v161
  %v392 = vxor.u32 %v391, 2147483648
  %v393 = vmul.f32 %v392, 1.442695
  %v394 = vpow.pop %v393
  %v395 = vadd.f32 %v394, 1.0
  %v396 = vrcp.pop %v395
  %v397 = vmul.f32 1.0, %v396
  %v398 = vtanh.pop %v391
  %400 = vrot.lane.b32.xlu0 %v168, 32
  %v401 = vpop.permute.xlu0 %400
  %v403 = vmul.f32 %v397, %v401
  %405 = vrot.lane.b32.xlu0 %v398, 64
  %v406 = vpop.permute.xlu0 %405
  %v408 = vmul.f32 %v397, %v406
  %410 = vrot.lane.b32.xlu0 %v408, 32
  %v411 = vpop.permute.xlu0 %410
  %v413 = vadd.f32 %v403, %v411
  %v414 = vtanh.pop %v413
  %416 = vrot.lane.b32.xlu0 %v414, 64
  %v417 = vpop.permute.xlu0 %416
  %v419 = vmul.f32 %v397, %v417
  %422 = vrot.lane.b32.xlu0 %v419, 64
  %v423 = vpop.permute.xlu0 %422
  %v425 = vsel %vm173, %v318, %v423
  %v427 = vsel %vm175, %v425, 0
  %429 = vmatprep.subr.mxu0 0.0
  %430 = vmatpush1.msra.mxu0 0.0
  %431 = vmatprep.subr.mxu0 0.0
  %432 = vmatpush1.msra.mxu0 0.0
  %433 = vmatprep.subr.mxu0 0.0
  %434 = vmatpush1.msra.mxu0 0.0
  %435 = vmatprep.subr.mxu0 0.0
  %436 = vmatpush1.msra.mxu0 0.0
  %437 = vmatprep.subr.mxu0 0.0
  %438 = vmatpush1.msra.mxu0 0.0
  %439 = vmatprep.subr.mxu0 0.0
  %440 = vmatpush1.msra.mxu0 0.0
  %441 = vmatprep.subr.mxu0 0.0
  %442 = vmatpush1.msra.mxu0 0.0
  %443 = vmatprep.subr.mxu0 0.0
  %444 = vmatpush1.msra.mxu0 0.0
  %445 = vmatprep.subr.mxu0 %v151
  %446 = vmatpush1.msra.mxu0 %v150
  %447 = vmatprep.subr.mxu0 %v149
  %448 = vmatpush1.msra.mxu0 %v148
  %449 = vmatprep.subr.mxu0 %v147
  %450 = vmatpush1.msra.mxu0 %v146
  %451 = vmatprep.subr.mxu0 %v145
  %452 = vmatpush1.msra.mxu0 %v144
  %453 = vmatprep.subr.mxu0 %v143
  %454 = vmatpush1.msra.mxu0 %v142
  %455 = vmatprep.subr.mxu0 %v141
  %456 = vmatpush1.msra.mxu0 %v140
  %457 = vmatprep.subr.mxu0 %v139
  %458 = vmatpush1.msra.mxu0 %v138
  %459 = vmatprep.subr.mxu0 %v137
  %460 = vmatpush1.msra.mxu0 %v136
  %461 = vmatprep.subr.mxu0 0.0
  %462 = vmatpush2.msra.mxu0 0.0
  %463 = vmatprep.subr.mxu0 0.0
  %464 = vmatpush2.msra.mxu0 0.0
  %465 = vmatprep.subr.mxu0 0.0
  %466 = vmatpush2.msra.mxu0 0.0
  %467 = vmatprep.subr.mxu0 0.0
  %468 = vmatpush2.msra.mxu0 0.0
  %469 = vmatprep.subr.mxu0 0.0
  %470 = vmatpush2.msra.mxu0 0.0
  %471 = vmatprep.subr.mxu0 0.0
  %472 = vmatpush2.msra.mxu0 0.0
  %473 = vmatprep.subr.mxu0 0.0
  %474 = vmatpush2.msra.mxu0 0.0
  %475 = vmatprep.subr.mxu0 0.0
  %476 = vmatpush2.msra.mxu0 0.0
  %477 = vmatprep.subr.mxu0 0.0
  %478 = vmatpush2.msra.mxu0 0.0
  %479 = vmatprep.subr.mxu0 0.0
  %480 = vmatpush2.msra.mxu0 0.0
  %481 = vmatprep.subr.mxu0 0.0
  %482 = vmatpush2.msra.mxu0 0.0
  %483 = vmatprep.subr.mxu0 0.0
  %484 = vmatpush2.msra.mxu0 0.0
  %485 = vmatprep.subr.mxu0 0.0
  %486 = vmatpush2.msra.mxu0 0.0
  %487 = vmatprep.subr.mxu0 0.0
  %488 = vmatpush2.msra.mxu0 0.0
  %489 = vmatprep.subr.mxu0 0.0
  %490 = vmatpush2.msra.mxu0 0.0
  %491 = vmatprep.subr.mxu0 0.0
  %492 = vmatpush2.msra.mxu0 0.0
  %493 = vmatprep.mubr.f32.mxu0 0.0
  %494 = vmatmul.mubr.f32.gmra.mxu0 %v427
  %v495 = vpop.f32.mrf.mxu0
  %v496 = vadd.f32 0.0, %v495
  %v497 = vpop.f32.mrf.mxu0
  %v498 = vadd.f32 0.0, %v497
  %499 = vdwg.mxu0
  %v501 = vrot.slane %v496, 7
  %v504 = vadd.f32 %v128, %v501
  %v505 = vadd.f32 %v133, %v496
  %v506 = vxor.u32 %v504, 2147483648
  %v507 = vxor.u32 %v505, 2147483648
  %v508 = vmul.f32 %v506, 1.442695
  %v509 = vpow.pop %v508
  %v510 = vmul.f32 %v507, 1.442695
  %v511 = vpow.pop %v510
  %v512 = vadd.f32 %v509, 1.0
  %v513 = vadd.f32 %v511, 1.0
  %v514 = vrcp.pop %v512
  %v515 = vmul.f32 1.0, %v514
  %v516 = vrcp.pop %v513
  %v517 = vmul.f32 1.0, %v516
  %v518 = vtanh.pop %v504
  %v519 = vtanh.pop %v505
  %v522 = vrot.slane %v298, 7
  %v523 = vrot.slane %v299, 7
  %v526 = vmul.f32 %v515, %v522
  %v527 = vmul.f32 %v517, %v523
  %530 = vrot.lane.b32.xlu0 %v518, 64
  %v531 = vpop.permute.xlu0 %530
  %532 = vrot.lane.b32.xlu0 %v519, 64
  %v533 = vpop.permute.xlu0 %532
  %v536 = vmul.f32 %v515, %v531
  %v537 = vmul.f32 %v517, %v533
  %540 = vrot.lane.b32.xlu0 %v536, 32
  %v541 = vpop.permute.xlu0 %540
  %542 = vrot.lane.b32.xlu0 %v537, 32
  %v543 = vpop.permute.xlu0 %542
  %v546 = vadd.f32 %v526, %v541
  %v547 = vadd.f32 %v527, %v543
  %v548 = vtanh.pop %v546
  %v549 = vtanh.pop %v547
  %552 = vrot.lane.b32.xlu0 %v548, 64
  %v553 = vpop.permute.xlu0 %552
  %554 = vrot.lane.b32.xlu0 %v549, 64
  %v555 = vpop.permute.xlu0 %554
  %v558 = vmul.f32 %v515, %v553
  %v559 = vmul.f32 %v517, %v555
  %v562 = vrot.slane %v558, 1
  %v563 = vsel %vm315, %v559, %v562
  %564 = vrot.lane.b32.xlu0 %v563, 32
  %v565 = vpop.permute.xlu0 %564
  %v566 = vsel %vm173, %v565, 0
  %568 = vmatprep.subr.mxu0 0.0
  %569 = vmatpush1.msra.mxu0 0.0
  %570 = vmatprep.subr.mxu0 0.0
  %571 = vmatpush1.msra.mxu0 0.0
  %572 = vmatprep.subr.mxu0 0.0
  %573 = vmatpush1.msra.mxu0 0.0
  %574 = vmatprep.subr.mxu0 0.0
  %575 = vmatpush1.msra.mxu0 0.0
  %576 = vmatprep.subr.mxu0 0.0
  %577 = vmatpush1.msra.mxu0 0.0
  %578 = vmatprep.subr.mxu0 0.0
  %579 = vmatpush1.msra.mxu0 0.0
  %580 = vmatprep.subr.mxu0 0.0
  %581 = vmatpush1.msra.mxu0 0.0
  %582 = vmatprep.subr.mxu0 0.0
  %583 = vmatpush1.msra.mxu0 0.0
  %584 = vmatprep.subr.mxu0 0.0
  %585 = vmatpush1.msra.mxu0 0.0
  %586 = vmatprep.subr.mxu0 0.0
  %587 = vmatpush1.msra.mxu0 0.0
  %588 = vmatprep.subr.mxu0 0.0
  %589 = vmatpush1.msra.mxu0 0.0
  %590 = vmatprep.subr.mxu0 0.0
  %591 = vmatpush1.msra.mxu0 0.0
  %592 = vmatprep.subr.mxu0 0.0
  %593 = vmatpush1.msra.mxu0 %v155
  %594 = vmatprep.subr.mxu0 0.0
  %595 = vmatpush1.msra.mxu0 %v154
  %596 = vmatprep.subr.mxu0 0.0
  %597 = vmatpush1.msra.mxu0 %v153
  %598 = vmatprep.subr.mxu0 0.0
  %599 = vmatpush1.msra.mxu0 %v152
  %600 = vmatprep.subr.mxu0 0.0
  %601 = vmatpush2.msra.mxu0 0.0
  %602 = vmatprep.subr.mxu0 0.0
  %603 = vmatpush2.msra.mxu0 0.0
  %604 = vmatprep.subr.mxu0 0.0
  %605 = vmatpush2.msra.mxu0 0.0
  %606 = vmatprep.subr.mxu0 0.0
  %607 = vmatpush2.msra.mxu0 0.0
  %608 = vmatprep.subr.mxu0 0.0
  %609 = vmatpush2.msra.mxu0 0.0
  %610 = vmatprep.subr.mxu0 0.0
  %611 = vmatpush2.msra.mxu0 0.0
  %612 = vmatprep.subr.mxu0 0.0
  %613 = vmatpush2.msra.mxu0 0.0
  %614 = vmatprep.subr.mxu0 0.0
  %615 = vmatpush2.msra.mxu0 0.0
  %616 = vmatprep.subr.mxu0 0.0
  %617 = vmatpush2.msra.mxu0 0.0
  %618 = vmatprep.subr.mxu0 0.0
  %619 = vmatpush2.msra.mxu0 0.0
  %620 = vmatprep.subr.mxu0 0.0
  %621 = vmatpush2.msra.mxu0 0.0
  %622 = vmatprep.subr.mxu0 0.0
  %623 = vmatpush2.msra.mxu0 0.0
  %624 = vmatprep.subr.mxu0 0.0
  %625 = vmatpush2.msra.mxu0 0.0
  %626 = vmatprep.subr.mxu0 0.0
  %627 = vmatpush2.msra.mxu0 0.0
  %628 = vmatprep.subr.mxu0 0.0
  %629 = vmatpush2.msra.mxu0 0.0
  %630 = vmatprep.subr.mxu0 0.0
  %631 = vmatpush2.msra.mxu0 0.0
  %632 = vmatprep.mubr.f32.mxu0 0.0
  %633 = vmatmul.mubr.f32.gmra.mxu0 %v566
  %v634 = vpop.f32.mrf.mxu0
  %v635 = vadd.f32 %v498, %v634
  %v636 = vpop.f32.mrf.mxu0
  %637 = vdwg.mxu0
  %v638 = vadd.f32 %v635, %v161
  %v639 = vxor.u32 %v638, 2147483648
  %v640 = vmul.f32 %v639, 1.442695
  %v641 = vpow.pop %v640
  %v642 = vadd.f32 %v641, 1.0
  %v643 = vrcp.pop %v642
  %v644 = vmul.f32 1.0, %v643
  %v645 = vtanh.pop %v638
  %v646 = vmul.f32 %v644, %v413
  %648 = vrot.lane.b32.xlu0 %v645, 64
  %v649 = vpop.permute.xlu0 %648
  %v651 = vmul.f32 %v644, %v649
  %653 = vrot.lane.b32.xlu0 %v651, 32
  %v654 = vpop.permute.xlu0 %653
  %v656 = vadd.f32 %v646, %v654
  %v657 = vtanh.pop %v656
  %659 = vrot.lane.b32.xlu0 %v657, 64
  %v660 = vpop.permute.xlu0 %659
  %v662 = vmul.f32 %v644, %v660
  %v663 = vrot.slane %v559, 7
  %vm664 = vcmask 1042434
  %v665 = vsel %vm664, %v663, %v558
  %666 = vrot.lane.b32.xlu0 %v665, 32
  %v667 = vpop.permute.xlu0 %666
  %v670 = vrot.slane %v662, 7
  %671 = vrot.lane.b32.xlu0 %v670, 64
  %v672 = vpop.permute.xlu0 %671
  %v674 = vsel %vm173, %v667, %v672
  %v676 = vrot.slane %v674, 1
  %v677 = vsel %vm175, %v676, 0
  %679 = vmatprep.subr.mxu0 0.0
  %680 = vmatpush1.msra.mxu0 0.0
  %681 = vmatprep.subr.mxu0 0.0
  %682 = vmatpush1.msra.mxu0 0.0
  %683 = vmatprep.subr.mxu0 0.0
  %684 = vmatpush1.msra.mxu0 0.0
  %685 = vmatprep.subr.mxu0 0.0
  %686 = vmatpush1.msra.mxu0 0.0
  %687 = vmatprep.subr.mxu0 0.0
  %688 = vmatpush1.msra.mxu0 0.0
  %689 = vmatprep.subr.mxu0 0.0
  %690 = vmatpush1.msra.mxu0 0.0
  %691 = vmatprep.subr.mxu0 0.0
  %692 = vmatpush1.msra.mxu0 0.0
  %693 = vmatprep.subr.mxu0 0.0
  %694 = vmatpush1.msra.mxu0 0.0
  %695 = vmatprep.subr.mxu0 %v151
  %696 = vmatpush1.msra.mxu0 %v150
  %697 = vmatprep.subr.mxu0 %v149
  %698 = vmatpush1.msra.mxu0 %v148
  %699 = vmatprep.subr.mxu0 %v147
  %700 = vmatpush1.msra.mxu0 %v146
  %701 = vmatprep.subr.mxu0 %v145
  %702 = vmatpush1.msra.mxu0 %v144
  %703 = vmatprep.subr.mxu0 %v143
  %704 = vmatpush1.msra.mxu0 %v142
  %705 = vmatprep.subr.mxu0 %v141
  %706 = vmatpush1.msra.mxu0 %v140
  %707 = vmatprep.subr.mxu0 %v139
  %708 = vmatpush1.msra.mxu0 %v138
  %709 = vmatprep.subr.mxu0 %v137
  %710 = vmatpush1.msra.mxu0 %v136
  %711 = vmatprep.subr.mxu0 0.0
  %712 = vmatpush2.msra.mxu0 0.0
  %713 = vmatprep.subr.mxu0 0.0
  %714 = vmatpush2.msra.mxu0 0.0
  %715 = vmatprep.subr.mxu0 0.0
  %716 = vmatpush2.msra.mxu0 0.0
  %717 = vmatprep.subr.mxu0 0.0
  %718 = vmatpush2.msra.mxu0 0.0
  %719 = vmatprep.subr.mxu0 0.0
  %720 = vmatpush2.msra.mxu0 0.0
  %721 = vmatprep.subr.mxu0 0.0
  %722 = vmatpush2.msra.mxu0 0.0
  %723 = vmatprep.subr.mxu0 0.0
  %724 = vmatpush2.msra.mxu0 0.0
  %725 = vmatprep.subr.mxu0 0.0
  %726 = vmatpush2.msra.mxu0 0.0
  %727 = vmatprep.subr.mxu0 0.0
  %728 = vmatpush2.msra.mxu0 0.0
  %729 = vmatprep.subr.mxu0 0.0
  %730 = vmatpush2.msra.mxu0 0.0
  %731 = vmatprep.subr.mxu0 0.0
  %732 = vmatpush2.msra.mxu0 0.0
  %733 = vmatprep.subr.mxu0 0.0
  %734 = vmatpush2.msra.mxu0 0.0
  %735 = vmatprep.subr.mxu0 0.0
  %736 = vmatpush2.msra.mxu0 0.0
  %737 = vmatprep.subr.mxu0 0.0
  %738 = vmatpush2.msra.mxu0 0.0
  %739 = vmatprep.subr.mxu0 0.0
  %740 = vmatpush2.msra.mxu0 0.0
  %741 = vmatprep.subr.mxu0 0.0
  %742 = vmatpush2.msra.mxu0 0.0
  %743 = vmatprep.mubr.f32.mxu0 0.0
  %744 = vmatmul.mubr.f32.gmra.mxu0 %v677
  %v745 = vpop.f32.mrf.mxu0
  %v746 = vadd.f32 0.0, %v745
  %v747 = vpop.f32.mrf.mxu0
  %v748 = vadd.f32 0.0, %v747
  %749 = vdwg.mxu0
  %v751 = vrot.slane %v746, 6
  %v752 = vrot.slane %v746, 7
  %v755 = vadd.f32 %v128, %v751
  %v756 = vadd.f32 %v133, %v752
  %v757 = vxor.u32 %v755, 2147483648
  %v758 = vxor.u32 %v756, 2147483648
  %v759 = vmul.f32 %v757, 1.442695
  %v760 = vpow.pop %v759
  %v761 = vmul.f32 %v758, 1.442695
  %v762 = vpow.pop %v761
  %v763 = vadd.f32 %v760, 1.0
  %v764 = vadd.f32 %v762, 1.0
  %v765 = vrcp.pop %v763
  %v766 = vmul.f32 1.0, %v765
  %v767 = vrcp.pop %v764
  %v768 = vmul.f32 1.0, %v767
  %v769 = vtanh.pop %v755
  %v770 = vtanh.pop %v756
  %v773 = vrot.slane %v546, 7
  %v774 = vrot.slane %v547, 7
  %v777 = vmul.f32 %v766, %v773
  %v778 = vmul.f32 %v768, %v774
  %781 = vrot.lane.b32.xlu0 %v769, 64
  %v782 = vpop.permute.xlu0 %781
  %783 = vrot.lane.b32.xlu0 %v770, 64
  %v784 = vpop.permute.xlu0 %783
  %v787 = vmul.f32 %v766, %v782
  %v788 = vmul.f32 %v768, %v784
  %791 = vrot.lane.b32.xlu0 %v787, 32
  %v792 = vpop.permute.xlu0 %791
  %793 = vrot.lane.b32.xlu0 %v788, 32
  %v794 = vpop.permute.xlu0 %793
  %v797 = vadd.f32 %v777, %v792
  %v798 = vadd.f32 %v778, %v794
  %v799 = vtanh.pop %v797
  %v800 = vtanh.pop %v798
  %803 = vrot.lane.b32.xlu0 %v799, 64
  %v804 = vpop.permute.xlu0 %803
  %805 = vrot.lane.b32.xlu0 %v800, 64
  %v806 = vpop.permute.xlu0 %805
  %v809 = vmul.f32 %v766, %v804
  %v810 = vmul.f32 %v768, %v806
  %v813 = vrot.slane %v809, 2
  %v814 = vrot.slane %v810, 1
  %v815 = vsel %vm315, %v814, %v813
  %816 = vrot.lane.b32.xlu0 %v815, 32
  %v817 = vpop.permute.xlu0 %816
  %v818 = vsel %vm173, %v817, 0
  %820 = vmatprep.subr.mxu0 0.0
  %821 = vmatpush1.msra.mxu0 0.0
  %822 = vmatprep.subr.mxu0 0.0
  %823 = vmatpush1.msra.mxu0 0.0
  %824 = vmatprep.subr.mxu0 0.0
  %825 = vmatpush1.msra.mxu0 0.0
  %826 = vmatprep.subr.mxu0 0.0
  %827 = vmatpush1.msra.mxu0 0.0
  %828 = vmatprep.subr.mxu0 0.0
  %829 = vmatpush1.msra.mxu0 0.0
  %830 = vmatprep.subr.mxu0 0.0
  %831 = vmatpush1.msra.mxu0 0.0
  %832 = vmatprep.subr.mxu0 0.0
  %833 = vmatpush1.msra.mxu0 0.0
  %834 = vmatprep.subr.mxu0 0.0
  %835 = vmatpush1.msra.mxu0 0.0
  %836 = vmatprep.subr.mxu0 0.0
  %837 = vmatpush1.msra.mxu0 0.0
  %838 = vmatprep.subr.mxu0 0.0
  %839 = vmatpush1.msra.mxu0 0.0
  %840 = vmatprep.subr.mxu0 0.0
  %841 = vmatpush1.msra.mxu0 0.0
  %842 = vmatprep.subr.mxu0 0.0
  %843 = vmatpush1.msra.mxu0 0.0
  %844 = vmatprep.subr.mxu0 0.0
  %845 = vmatpush1.msra.mxu0 %v155
  %846 = vmatprep.subr.mxu0 0.0
  %847 = vmatpush1.msra.mxu0 %v154
  %848 = vmatprep.subr.mxu0 0.0
  %849 = vmatpush1.msra.mxu0 %v153
  %850 = vmatprep.subr.mxu0 0.0
  %851 = vmatpush1.msra.mxu0 %v152
  %852 = vmatprep.subr.mxu0 0.0
  %853 = vmatpush2.msra.mxu0 0.0
  %854 = vmatprep.subr.mxu0 0.0
  %855 = vmatpush2.msra.mxu0 0.0
  %856 = vmatprep.subr.mxu0 0.0
  %857 = vmatpush2.msra.mxu0 0.0
  %858 = vmatprep.subr.mxu0 0.0
  %859 = vmatpush2.msra.mxu0 0.0
  %860 = vmatprep.subr.mxu0 0.0
  %861 = vmatpush2.msra.mxu0 0.0
  %862 = vmatprep.subr.mxu0 0.0
  %863 = vmatpush2.msra.mxu0 0.0
  %864 = vmatprep.subr.mxu0 0.0
  %865 = vmatpush2.msra.mxu0 0.0
  %866 = vmatprep.subr.mxu0 0.0
  %867 = vmatpush2.msra.mxu0 0.0
  %868 = vmatprep.subr.mxu0 0.0
  %869 = vmatpush2.msra.mxu0 0.0
  %870 = vmatprep.subr.mxu0 0.0
  %871 = vmatpush2.msra.mxu0 0.0
  %872 = vmatprep.subr.mxu0 0.0
  %873 = vmatpush2.msra.mxu0 0.0
  %874 = vmatprep.subr.mxu0 0.0
  %875 = vmatpush2.msra.mxu0 0.0
  %876 = vmatprep.subr.mxu0 0.0
  %877 = vmatpush2.msra.mxu0 0.0
  %878 = vmatprep.subr.mxu0 0.0
  %879 = vmatpush2.msra.mxu0 0.0
  %880 = vmatprep.subr.mxu0 0.0
  %881 = vmatpush2.msra.mxu0 0.0
  %882 = vmatprep.subr.mxu0 0.0
  %883 = vmatpush2.msra.mxu0 0.0
  %884 = vmatprep.mubr.f32.mxu0 0.0
  %885 = vmatmul.mubr.f32.gmra.mxu0 %v818
  %v886 = vpop.f32.mrf.mxu0
  %v887 = vadd.f32 %v748, %v886
  %v888 = vpop.f32.mrf.mxu0
  %889 = vdwg.mxu0
  %v890 = vadd.f32 %v887, %v161
  %v891 = vxor.u32 %v890, 2147483648
  %v892 = vmul.f32 %v891, 1.442695
  %v893 = vpow.pop %v892
  %v894 = vadd.f32 %v893, 1.0
  %v895 = vrcp.pop %v894
  %v896 = vmul.f32 1.0, %v895
  %v897 = vtanh.pop %v890
  %v898 = vmul.f32 %v896, %v656
  %900 = vrot.lane.b32.xlu0 %v897, 64
  %v901 = vpop.permute.xlu0 %900
  %v903 = vmul.f32 %v896, %v901
  %905 = vrot.lane.b32.xlu0 %v903, 32
  %v906 = vpop.permute.xlu0 %905
  %v908 = vadd.f32 %v898, %v906
  %v909 = vtanh.pop %v908
  %911 = vrot.lane.b32.xlu0 %v909, 64
  %v912 = vpop.permute.xlu0 %911
  %v914 = vmul.f32 %v896, %v912
  %v915 = vrot.slane %v810, 7
  %vm916 = vcmask 1043459
  %v917 = vsel %vm916, %v915, %v809
  %918 = vrot.lane.b32.xlu0 %v917, 32
  %v919 = vpop.permute.xlu0 %918
  %v922 = vrot.slane %v914, 6
  %923 = vrot.lane.b32.xlu0 %v922, 64
  %v924 = vpop.permute.xlu0 %923
  %v926 = vsel %vm173, %v919, %v924
  %v928 = vrot.slane %v926, 2
  %v929 = vsel %vm175, %v928, 0
  %931 = vmatprep.subr.mxu0 0.0
  %932 = vmatpush1.msra.mxu0 0.0
  %933 = vmatprep.subr.mxu0 0.0
  %934 = vmatpush1.msra.mxu0 0.0
  %935 = vmatprep.subr.mxu0 0.0
  %936 = vmatpush1.msra.mxu0 0.0
  %937 = vmatprep.subr.mxu0 0.0
  %938 = vmatpush1.msra.mxu0 0.0
  %939 = vmatprep.subr.mxu0 0.0
  %940 = vmatpush1.msra.mxu0 0.0
  %941 = vmatprep.subr.mxu0 0.0
  %942 = vmatpush1.msra.mxu0 0.0
  %943 = vmatprep.subr.mxu0 0.0
  %944 = vmatpush1.msra.mxu0 0.0
  %945 = vmatprep.subr.mxu0 0.0
  %946 = vmatpush1.msra.mxu0 0.0
  %947 = vmatprep.subr.mxu0 %v151
  %948 = vmatpush1.msra.mxu0 %v150
  %949 = vmatprep.subr.mxu0 %v149
  %950 = vmatpush1.msra.mxu0 %v148
  %951 = vmatprep.subr.mxu0 %v147
  %952 = vmatpush1.msra.mxu0 %v146
  %953 = vmatprep.subr.mxu0 %v145
  %954 = vmatpush1.msra.mxu0 %v144
  %955 = vmatprep.subr.mxu0 %v143
  %956 = vmatpush1.msra.mxu0 %v142
  %957 = vmatprep.subr.mxu0 %v141
  %958 = vmatpush1.msra.mxu0 %v140
  %959 = vmatprep.subr.mxu0 %v139
  %960 = vmatpush1.msra.mxu0 %v138
  %961 = vmatprep.subr.mxu0 %v137
  %962 = vmatpush1.msra.mxu0 %v136
  %963 = vmatprep.subr.mxu0 0.0
  %964 = vmatpush2.msra.mxu0 0.0
  %965 = vmatprep.subr.mxu0 0.0
  %966 = vmatpush2.msra.mxu0 0.0
  %967 = vmatprep.subr.mxu0 0.0
  %968 = vmatpush2.msra.mxu0 0.0
  %969 = vmatprep.subr.mxu0 0.0
  %970 = vmatpush2.msra.mxu0 0.0
  %971 = vmatprep.subr.mxu0 0.0
  %972 = vmatpush2.msra.mxu0 0.0
  %973 = vmatprep.subr.mxu0 0.0
  %974 = vmatpush2.msra.mxu0 0.0
  %975 = vmatprep.subr.mxu0 0.0
  %976 = vmatpush2.msra.mxu0 0.0
  %977 = vmatprep.subr.mxu0 0.0
  %978 = vmatpush2.msra.mxu0 0.0
  %979 = vmatprep.subr.mxu0 0.0
  %980 = vmatpush2.msra.mxu0 0.0
  %981 = vmatprep.subr.mxu0 0.0
  %982 = vmatpush2.msra.mxu0 0.0
  %983 = vmatprep.subr.mxu0 0.0
  %984 = vmatpush2.msra.mxu0 0.0
  %985 = vmatprep.subr.mxu0 0.0
  %986 = vmatpush2.msra.mxu0 0.0
  %987 = vmatprep.subr.mxu0 0.0
  %988 = vmatpush2.msra.mxu0 0.0
  %989 = vmatprep.subr.mxu0 0.0
  %990 = vmatpush2.msra.mxu0 0.0
  %991 = vmatprep.subr.mxu0 0.0
  %992 = vmatpush2.msra.mxu0 0.0
  %993 = vmatprep.subr.mxu0 0.0
  %994 = vmatpush2.msra.mxu0 0.0
  %995 = vmatprep.mubr.f32.mxu0 0.0
  %996 = vmatmul.mubr.f32.gmra.mxu0 %v929
  %v997 = vpop.f32.mrf.mxu0
  %v998 = vadd.f32 0.0, %v997
  %v999 = vpop.f32.mrf.mxu0
  %v1000 = vadd.f32 0.0, %v999
  %1001 = vdwg.mxu0
  %v1003 = vrot.slane %v998, 5
  %v1004 = vrot.slane %v998, 6
  %v1007 = vadd.f32 %v128, %v1003
  %v1008 = vadd.f32 %v133, %v1004
  %v1009 = vxor.u32 %v1007, 2147483648
  %v1010 = vxor.u32 %v1008, 2147483648
  %v1011 = vmul.f32 %v1009, 1.442695
  %v1012 = vpow.pop %v1011
  %v1013 = vmul.f32 %v1010, 1.442695
  %v1014 = vpow.pop %v1013
  %v1015 = vadd.f32 %v1012, 1.0
  %v1016 = vadd.f32 %v1014, 1.0
  %v1017 = vrcp.pop %v1015
  %v1018 = vmul.f32 1.0, %v1017
  %v1019 = vrcp.pop %v1016
  %v1020 = vmul.f32 1.0, %v1019
  %v1021 = vtanh.pop %v1007
  %v1022 = vtanh.pop %v1008
  %v1025 = vrot.slane %v797, 7
  %v1026 = vrot.slane %v798, 7
  %v1029 = vmul.f32 %v1018, %v1025
  %v1030 = vmul.f32 %v1020, %v1026
  %1033 = vrot.lane.b32.xlu0 %v1021, 64
  %v1034 = vpop.permute.xlu0 %1033
  %1035 = vrot.lane.b32.xlu0 %v1022, 64
  %v1036 = vpop.permute.xlu0 %1035
  %v1039 = vmul.f32 %v1018, %v1034
  %v1040 = vmul.f32 %v1020, %v1036
  %1043 = vrot.lane.b32.xlu0 %v1039, 32
  %v1044 = vpop.permute.xlu0 %1043
  %1045 = vrot.lane.b32.xlu0 %v1040, 32
  %v1046 = vpop.permute.xlu0 %1045
  %v1049 = vadd.f32 %v1029, %v1044
  %v1050 = vadd.f32 %v1030, %v1046
  %v1051 = vtanh.pop %v1049
  %v1052 = vtanh.pop %v1050
  %1055 = vrot.lane.b32.xlu0 %v1051, 64
  %v1056 = vpop.permute.xlu0 %1055
  %1057 = vrot.lane.b32.xlu0 %v1052, 64
  %v1058 = vpop.permute.xlu0 %1057
  %v1061 = vmul.f32 %v1018, %v1056
  %v1062 = vmul.f32 %v1020, %v1058
  %v1065 = vrot.slane %v1061, 3
  %v1066 = vrot.slane %v1062, 2
  %v1067 = vsel %vm315, %v1066, %v1065
  %1068 = vrot.lane.b32.xlu0 %v1067, 32
  %v1069 = vpop.permute.xlu0 %1068
  %v1070 = vsel %vm173, %v1069, 0
  %1072 = vmatprep.subr.mxu0 0.0
  %1073 = vmatpush1.msra.mxu0 0.0
  %1074 = vmatprep.subr.mxu0 0.0
  %1075 = vmatpush1.msra.mxu0 0.0
  %1076 = vmatprep.subr.mxu0 0.0
  %1077 = vmatpush1.msra.mxu0 0.0
  %1078 = vmatprep.subr.mxu0 0.0
  %1079 = vmatpush1.msra.mxu0 0.0
  %1080 = vmatprep.subr.mxu0 0.0
  %1081 = vmatpush1.msra.mxu0 0.0
  %1082 = vmatprep.subr.mxu0 0.0
  %1083 = vmatpush1.msra.mxu0 0.0
  %1084 = vmatprep.subr.mxu0 0.0
  %1085 = vmatpush1.msra.mxu0 0.0
  %1086 = vmatprep.subr.mxu0 0.0
  %1087 = vmatpush1.msra.mxu0 0.0
  %1088 = vmatprep.subr.mxu0 0.0
  %1089 = vmatpush1.msra.mxu0 0.0
  %1090 = vmatprep.subr.mxu0 0.0
  %1091 = vmatpush1.msra.mxu0 0.0
  %1092 = vmatprep.subr.mxu0 0.0
  %1093 = vmatpush1.msra.mxu0 0.0
  %1094 = vmatprep.subr.mxu0 0.0
  %1095 = vmatpush1.msra.mxu0 0.0
  %1096 = vmatprep.subr.mxu0 0.0
  %1097 = vmatpush1.msra.mxu0 %v155
  %1098 = vmatprep.subr.mxu0 0.0
  %1099 = vmatpush1.msra.mxu0 %v154
  %1100 = vmatprep.subr.mxu0 0.0
  %1101 = vmatpush1.msra.mxu0 %v153
  %1102 = vmatprep.subr.mxu0 0.0
  %1103 = vmatpush1.msra.mxu0 %v152
  %1104 = vmatprep.subr.mxu0 0.0
  %1105 = vmatpush2.msra.mxu0 0.0
  %1106 = vmatprep.subr.mxu0 0.0
  %1107 = vmatpush2.msra.mxu0 0.0
  %1108 = vmatprep.subr.mxu0 0.0
  %1109 = vmatpush2.msra.mxu0 0.0
  %1110 = vmatprep.subr.mxu0 0.0
  %1111 = vmatpush2.msra.mxu0 0.0
  %1112 = vmatprep.subr.mxu0 0.0
  %1113 = vmatpush2.msra.mxu0 0.0
  %1114 = vmatprep.subr.mxu0 0.0
  %1115 = vmatpush2.msra.mxu0 0.0
  %1116 = vmatprep.subr.mxu0 0.0
  %1117 = vmatpush2.msra.mxu0 0.0
  %1118 = vmatprep.subr.mxu0 0.0
  %1119 = vmatpush2.msra.mxu0 0.0
  %1120 = vmatprep.subr.mxu0 0.0
  %1121 = vmatpush2.msra.mxu0 0.0
  %1122 = vmatprep.subr.mxu0 0.0
  %1123 = vmatpush2.msra.mxu0 0.0
  %1124 = vmatprep.subr.mxu0 0.0
  %1125 = vmatpush2.msra.mxu0 0.0
  %1126 = vmatprep.subr.mxu0 0.0
  %1127 = vmatpush2.msra.mxu0 0.0
  %1128 = vmatprep.subr.mxu0 0.0
  %1129 = vmatpush2.msra.mxu0 0.0
  %1130 = vmatprep.subr.mxu0 0.0
  %1131 = vmatpush2.msra.mxu0 0.0
  %1132 = vmatprep.subr.mxu0 0.0
  %1133 = vmatpush2.msra.mxu0 0.0
  %1134 = vmatprep.subr.mxu0 0.0
  %1135 = vmatpush2.msra.mxu0 0.0
  %1136 = vmatprep.mubr.f32.mxu0 0.0
  %1137 = vmatmul.mubr.f32.gmra.mxu0 %v1070
  %v1138 = vpop.f32.mrf.mxu0
  %v1139 = vadd.f32 %v1000, %v1138
  %v1140 = vpop.f32.mrf.mxu0
  %1141 = vdwg.mxu0
  %v1142 = vadd.f32 %v1139, %v161
  %v1143 = vxor.u32 %v1142, 2147483648
  %v1144 = vmul.f32 %v1143, 1.442695
  %v1145 = vpow.pop %v1144
  %v1146 = vadd.f32 %v1145, 1.0
  %v1147 = vrcp.pop %v1146
  %v1148 = vmul.f32 1.0, %v1147
  %v1149 = vtanh.pop %v1142
  %v1150 = vmul.f32 %v1148, %v908
  %1152 = vrot.lane.b32.xlu0 %v1149, 64
  %v1153 = vpop.permute.xlu0 %1152
  %v1155 = vmul.f32 %v1148, %v1153
  %1157 = vrot.lane.b32.xlu0 %v1155, 32
  %v1158 = vpop.permute.xlu0 %1157
  %v1160 = vadd.f32 %v1150, %v1158
  %v1161 = vtanh.pop %v1160
  %1163 = vrot.lane.b32.xlu0 %v1161, 64
  %v1164 = vpop.permute.xlu0 %1163
  %v1166 = vmul.f32 %v1148, %v1164
  %v1167 = vrot.slane %v1062, 7
  %vm1168 = vcmask 1044484
  %v1169 = vsel %vm1168, %v1167, %v1061
  %1170 = vrot.lane.b32.xlu0 %v1169, 32
  %v1171 = vpop.permute.xlu0 %1170
  %v1174 = vrot.slane %v1166, 5
  %1175 = vrot.lane.b32.xlu0 %v1174, 64
  %v1176 = vpop.permute.xlu0 %1175
  %v1178 = vsel %vm173, %v1171, %v1176
  %v1180 = vrot.slane %v1178, 3
  %v1181 = vsel %vm175, %v1180, 0
  %1183 = vmatprep.subr.mxu0 0.0
  %1184 = vmatpush1.msra.mxu0 0.0
  %1185 = vmatprep.subr.mxu0 0.0
  %1186 = vmatpush1.msra.mxu0 0.0
  %1187 = vmatprep.subr.mxu0 0.0
  %1188 = vmatpush1.msra.mxu0 0.0
  %1189 = vmatprep.subr.mxu0 0.0
  %1190 = vmatpush1.msra.mxu0 0.0
  %1191 = vmatprep.subr.mxu0 0.0
  %1192 = vmatpush1.msra.mxu0 0.0
  %1193 = vmatprep.subr.mxu0 0.0
  %1194 = vmatpush1.msra.mxu0 0.0
  %1195 = vmatprep.subr.mxu0 0.0
  %1196 = vmatpush1.msra.mxu0 0.0
  %1197 = vmatprep.subr.mxu0 0.0
  %1198 = vmatpush1.msra.mxu0 0.0
  %1199 = vmatprep.subr.mxu0 %v151
  %1200 = vmatpush1.msra.mxu0 %v150
  %1201 = vmatprep.subr.mxu0 %v149
  %1202 = vmatpush1.msra.mxu0 %v148
  %1203 = vmatprep.subr.mxu0 %v147
  %1204 = vmatpush1.msra.mxu0 %v146
  %1205 = vmatprep.subr.mxu0 %v145
  %1206 = vmatpush1.msra.mxu0 %v144
  %1207 = vmatprep.subr.mxu0 %v143
  %1208 = vmatpush1.msra.mxu0 %v142
  %1209 = vmatprep.subr.mxu0 %v141
  %1210 = vmatpush1.msra.mxu0 %v140
  %1211 = vmatprep.subr.mxu0 %v139
  %1212 = vmatpush1.msra.mxu0 %v138
  %1213 = vmatprep.subr.mxu0 %v137
  %1214 = vmatpush1.msra.mxu0 %v136
  %1215 = vmatprep.subr.mxu0 0.0
  %1216 = vmatpush2.msra.mxu0 0.0
  %1217 = vmatprep.subr.mxu0 0.0
  %1218 = vmatpush2.msra.mxu0 0.0
  %1219 = vmatprep.subr.mxu0 0.0
  %1220 = vmatpush2.msra.mxu0 0.0
  %1221 = vmatprep.subr.mxu0 0.0
  %1222 = vmatpush2.msra.mxu0 0.0
  %1223 = vmatprep.subr.mxu0 0.0
  %1224 = vmatpush2.msra.mxu0 0.0
  %1225 = vmatprep.subr.mxu0 0.0
  %1226 = vmatpush2.msra.mxu0 0.0
  %1227 = vmatprep.subr.mxu0 0.0
  %1228 = vmatpush2.msra.mxu0 0.0
  %1229 = vmatprep.subr.mxu0 0.0
  %1230 = vmatpush2.msra.mxu0 0.0
  %1231 = vmatprep.subr.mxu0 0.0
  %1232 = vmatpush2.msra.mxu0 0.0
  %1233 = vmatprep.subr.mxu0 0.0
  %1234 = vmatpush2.msra.mxu0 0.0
  %1235 = vmatprep.subr.mxu0 0.0
  %1236 = vmatpush2.msra.mxu0 0.0
  %1237 = vmatprep.subr.mxu0 0.0
  %1238 = vmatpush2.msra.mxu0 0.0
  %1239 = vmatprep.subr.mxu0 0.0
  %1240 = vmatpush2.msra.mxu0 0.0
  %1241 = vmatprep.subr.mxu0 0.0
  %1242 = vmatpush2.msra.mxu0 0.0
  %1243 = vmatprep.subr.mxu0 0.0
  %1244 = vmatpush2.msra.mxu0 0.0
  %1245 = vmatprep.subr.mxu0 0.0
  %1246 = vmatpush2.msra.mxu0 0.0
  %1247 = vmatprep.mubr.f32.mxu0 0.0
  %1248 = vmatmul.mubr.f32.gmra.mxu0 %v1181
  %v1249 = vpop.f32.mrf.mxu0
  %v1250 = vadd.f32 0.0, %v1249
  %v1251 = vpop.f32.mrf.mxu0
  %v1252 = vadd.f32 0.0, %v1251
  %1253 = vdwg.mxu0
  %v1255 = vrot.slane %v1250, 4
  %v1256 = vrot.slane %v1250, 5
  %v1259 = vadd.f32 %v128, %v1255
  %v1260 = vadd.f32 %v133, %v1256
  %v1261 = vxor.u32 %v1259, 2147483648
  %v1262 = vxor.u32 %v1260, 2147483648
  %v1263 = vmul.f32 %v1261, 1.442695
  %v1264 = vpow.pop %v1263
  %v1265 = vmul.f32 %v1262, 1.442695
  %v1266 = vpow.pop %v1265
  %v1267 = vadd.f32 %v1264, 1.0
  %v1268 = vadd.f32 %v1266, 1.0
  %v1269 = vrcp.pop %v1267
  %v1270 = vmul.f32 1.0, %v1269
  %v1271 = vrcp.pop %v1268
  %v1272 = vmul.f32 1.0, %v1271
  %v1273 = vtanh.pop %v1259
  %v1274 = vtanh.pop %v1260
  %v1277 = vrot.slane %v1049, 7
  %v1278 = vrot.slane %v1050, 7
  %v1281 = vmul.f32 %v1270, %v1277
  %v1282 = vmul.f32 %v1272, %v1278
  %1285 = vrot.lane.b32.xlu0 %v1273, 64
  %v1286 = vpop.permute.xlu0 %1285
  %1287 = vrot.lane.b32.xlu0 %v1274, 64
  %v1288 = vpop.permute.xlu0 %1287
  %v1291 = vmul.f32 %v1270, %v1286
  %v1292 = vmul.f32 %v1272, %v1288
  %1295 = vrot.lane.b32.xlu0 %v1291, 32
  %v1296 = vpop.permute.xlu0 %1295
  %1297 = vrot.lane.b32.xlu0 %v1292, 32
  %v1298 = vpop.permute.xlu0 %1297
  %v1301 = vadd.f32 %v1281, %v1296
  %v1302 = vadd.f32 %v1282, %v1298
  %v1303 = vtanh.pop %v1301
  %v1304 = vtanh.pop %v1302
  %1307 = vrot.lane.b32.xlu0 %v1303, 64
  %v1308 = vpop.permute.xlu0 %1307
  %1309 = vrot.lane.b32.xlu0 %v1304, 64
  %v1310 = vpop.permute.xlu0 %1309
  %v1313 = vmul.f32 %v1270, %v1308
  %v1314 = vmul.f32 %v1272, %v1310
  %v1317 = vrot.slane %v1313, 4
  %v1318 = vrot.slane %v1314, 3
  %v1319 = vsel %vm315, %v1318, %v1317
  %1320 = vrot.lane.b32.xlu0 %v1319, 32
  %v1321 = vpop.permute.xlu0 %1320
  %v1322 = vsel %vm173, %v1321, 0
  %1324 = vmatprep.subr.mxu0 0.0
  %1325 = vmatpush1.msra.mxu0 0.0
  %1326 = vmatprep.subr.mxu0 0.0
  %1327 = vmatpush1.msra.mxu0 0.0
  %1328 = vmatprep.subr.mxu0 0.0
  %1329 = vmatpush1.msra.mxu0 0.0
  %1330 = vmatprep.subr.mxu0 0.0
  %1331 = vmatpush1.msra.mxu0 0.0
  %1332 = vmatprep.subr.mxu0 0.0
  %1333 = vmatpush1.msra.mxu0 0.0
  %1334 = vmatprep.subr.mxu0 0.0
  %1335 = vmatpush1.msra.mxu0 0.0
  %1336 = vmatprep.subr.mxu0 0.0
  %1337 = vmatpush1.msra.mxu0 0.0
  %1338 = vmatprep.subr.mxu0 0.0
  %1339 = vmatpush1.msra.mxu0 0.0
  %1340 = vmatprep.subr.mxu0 0.0
  %1341 = vmatpush1.msra.mxu0 0.0
  %1342 = vmatprep.subr.mxu0 0.0
  %1343 = vmatpush1.msra.mxu0 0.0
  %1344 = vmatprep.subr.mxu0 0.0
  %1345 = vmatpush1.msra.mxu0 0.0
  %1346 = vmatprep.subr.mxu0 0.0
  %1347 = vmatpush1.msra.mxu0 0.0
  %1348 = vmatprep.subr.mxu0 0.0
  %1349 = vmatpush1.msra.mxu0 %v155
  %1350 = vmatprep.subr.mxu0 0.0
  %1351 = vmatpush1.msra.mxu0 %v154
  %1352 = vmatprep.subr.mxu0 0.0
  %1353 = vmatpush1.msra.mxu0 %v153
  %1354 = vmatprep.subr.mxu0 0.0
  %1355 = vmatpush1.msra.mxu0 %v152
  %1356 = vmatprep.subr.mxu0 0.0
  %1357 = vmatpush2.msra.mxu0 0.0
  %1358 = vmatprep.subr.mxu0 0.0
  %1359 = vmatpush2.msra.mxu0 0.0
  %1360 = vmatprep.subr.mxu0 0.0
  %1361 = vmatpush2.msra.mxu0 0.0
  %1362 = vmatprep.subr.mxu0 0.0
  %1363 = vmatpush2.msra.mxu0 0.0
  %1364 = vmatprep.subr.mxu0 0.0
  %1365 = vmatpush2.msra.mxu0 0.0
  %1366 = vmatprep.subr.mxu0 0.0
  %1367 = vmatpush2.msra.mxu0 0.0
  %1368 = vmatprep.subr.mxu0 0.0
  %1369 = vmatpush2.msra.mxu0 0.0
  %1370 = vmatprep.subr.mxu0 0.0
  %1371 = vmatpush2.msra.mxu0 0.0
  %1372 = vmatprep.subr.mxu0 0.0
  %1373 = vmatpush2.msra.mxu0 0.0
  %1374 = vmatprep.subr.mxu0 0.0
  %1375 = vmatpush2.msra.mxu0 0.0
  %1376 = vmatprep.subr.mxu0 0.0
  %1377 = vmatpush2.msra.mxu0 0.0
  %1378 = vmatprep.subr.mxu0 0.0
  %1379 = vmatpush2.msra.mxu0 0.0
  %1380 = vmatprep.subr.mxu0 0.0
  %1381 = vmatpush2.msra.mxu0 0.0
  %1382 = vmatprep.subr.mxu0 0.0
  %1383 = vmatpush2.msra.mxu0 0.0
  %1384 = vmatprep.subr.mxu0 0.0
  %1385 = vmatpush2.msra.mxu0 0.0
  %1386 = vmatprep.subr.mxu0 0.0
  %1387 = vmatpush2.msra.mxu0 0.0
  %1388 = vmatprep.mubr.f32.mxu0 0.0
  %1389 = vmatmul.mubr.f32.gmra.mxu0 %v1322
  %v1390 = vpop.f32.mrf.mxu0
  %v1391 = vadd.f32 %v1252, %v1390
  %v1392 = vpop.f32.mrf.mxu0
  %1393 = vdwg.mxu0
  %v1394 = vadd.f32 %v1391, %v161
  %v1395 = vxor.u32 %v1394, 2147483648
  %v1396 = vmul.f32 %v1395, 1.442695
  %v1397 = vpow.pop %v1396
  %v1398 = vadd.f32 %v1397, 1.0
  %v1399 = vrcp.pop %v1398
  %v1400 = vmul.f32 1.0, %v1399
  %v1401 = vtanh.pop %v1394
  %v1402 = vmul.f32 %v1400, %v1160
  %1404 = vrot.lane.b32.xlu0 %v1401, 64
  %v1405 = vpop.permute.xlu0 %1404
  %v1407 = vmul.f32 %v1400, %v1405
  %1409 = vrot.lane.b32.xlu0 %v1407, 32
  %v1410 = vpop.permute.xlu0 %1409
  %v1412 = vadd.f32 %v1402, %v1410
  %v1413 = vtanh.pop %v1412
  %1415 = vrot.lane.b32.xlu0 %v1413, 64
  %v1416 = vpop.permute.xlu0 %1415
  %v1418 = vmul.f32 %v1400, %v1416
  %v1419 = vrot.slane %v1314, 7
  %vm1420 = vcmask 1045509
  %v1421 = vsel %vm1420, %v1419, %v1313
  %1422 = vrot.lane.b32.xlu0 %v1421, 32
  %v1423 = vpop.permute.xlu0 %1422
  %v1426 = vrot.slane %v1418, 4
  %1427 = vrot.lane.b32.xlu0 %v1426, 64
  %v1428 = vpop.permute.xlu0 %1427
  %v1430 = vsel %vm173, %v1423, %v1428
  %v1432 = vrot.slane %v1430, 4
  %v1433 = vsel %vm175, %v1432, 0
  %1435 = vmatprep.subr.mxu0 0.0
  %1436 = vmatpush1.msra.mxu0 0.0
  %1437 = vmatprep.subr.mxu0 0.0
  %1438 = vmatpush1.msra.mxu0 0.0
  %1439 = vmatprep.subr.mxu0 0.0
  %1440 = vmatpush1.msra.mxu0 0.0
  %1441 = vmatprep.subr.mxu0 0.0
  %1442 = vmatpush1.msra.mxu0 0.0
  %1443 = vmatprep.subr.mxu0 0.0
  %1444 = vmatpush1.msra.mxu0 0.0
  %1445 = vmatprep.subr.mxu0 0.0
  %1446 = vmatpush1.msra.mxu0 0.0
  %1447 = vmatprep.subr.mxu0 0.0
  %1448 = vmatpush1.msra.mxu0 0.0
  %1449 = vmatprep.subr.mxu0 0.0
  %1450 = vmatpush1.msra.mxu0 0.0
  %1451 = vmatprep.subr.mxu0 %v151
  %1452 = vmatpush1.msra.mxu0 %v150
  %1453 = vmatprep.subr.mxu0 %v149
  %1454 = vmatpush1.msra.mxu0 %v148
  %1455 = vmatprep.subr.mxu0 %v147
  %1456 = vmatpush1.msra.mxu0 %v146
  %1457 = vmatprep.subr.mxu0 %v145
  %1458 = vmatpush1.msra.mxu0 %v144
  %1459 = vmatprep.subr.mxu0 %v143
  %1460 = vmatpush1.msra.mxu0 %v142
  %1461 = vmatprep.subr.mxu0 %v141
  %1462 = vmatpush1.msra.mxu0 %v140
  %1463 = vmatprep.subr.mxu0 %v139
  %1464 = vmatpush1.msra.mxu0 %v138
  %1465 = vmatprep.subr.mxu0 %v137
  %1466 = vmatpush1.msra.mxu0 %v136
  %1467 = vmatprep.subr.mxu0 0.0
  %1468 = vmatpush2.msra.mxu0 0.0
  %1469 = vmatprep.subr.mxu0 0.0
  %1470 = vmatpush2.msra.mxu0 0.0
  %1471 = vmatprep.subr.mxu0 0.0
  %1472 = vmatpush2.msra.mxu0 0.0
  %1473 = vmatprep.subr.mxu0 0.0
  %1474 = vmatpush2.msra.mxu0 0.0
  %1475 = vmatprep.subr.mxu0 0.0
  %1476 = vmatpush2.msra.mxu0 0.0
  %1477 = vmatprep.subr.mxu0 0.0
  %1478 = vmatpush2.msra.mxu0 0.0
  %1479 = vmatprep.subr.mxu0 0.0
  %1480 = vmatpush2.msra.mxu0 0.0
  %1481 = vmatprep.subr.mxu0 0.0
  %1482 = vmatpush2.msra.mxu0 0.0
  %1483 = vmatprep.subr.mxu0 0.0
  %1484 = vmatpush2.msra.mxu0 0.0
  %1485 = vmatprep.subr.mxu0 0.0
  %1486 = vmatpush2.msra.mxu0 0.0
  %1487 = vmatprep.subr.mxu0 0.0
  %1488 = vmatpush2.msra.mxu0 0.0
  %1489 = vmatprep.subr.mxu0 0.0
  %1490 = vmatpush2.msra.mxu0 0.0
  %1491 = vmatprep.subr.mxu0 0.0
  %1492 = vmatpush2.msra.mxu0 0.0
  %1493 = vmatprep.subr.mxu0 0.0
  %1494 = vmatpush2.msra.mxu0 0.0
  %1495 = vmatprep.subr.mxu0 0.0
  %1496 = vmatpush2.msra.mxu0 0.0
  %1497 = vmatprep.subr.mxu0 0.0
  %1498 = vmatpush2.msra.mxu0 0.0
  %1499 = vmatprep.mubr.f32.mxu0 0.0
  %1500 = vmatmul.mubr.f32.gmra.mxu0 %v1433
  %v1501 = vpop.f32.mrf.mxu0
  %v1502 = vadd.f32 0.0, %v1501
  %v1503 = vpop.f32.mrf.mxu0
  %v1504 = vadd.f32 0.0, %v1503
  %1505 = vdwg.mxu0
  %v1507 = vrot.slane %v1502, 3
  %v1508 = vrot.slane %v1502, 4
  %v1511 = vadd.f32 %v128, %v1507
  %v1512 = vadd.f32 %v133, %v1508
  %v1513 = vxor.u32 %v1511, 2147483648
  %v1514 = vxor.u32 %v1512, 2147483648
  %v1515 = vmul.f32 %v1513, 1.442695
  %v1516 = vpow.pop %v1515
  %v1517 = vmul.f32 %v1514, 1.442695
  %v1518 = vpow.pop %v1517
  %v1519 = vadd.f32 %v1516, 1.0
  %v1520 = vadd.f32 %v1518, 1.0
  %v1521 = vrcp.pop %v1519
  %v1522 = vmul.f32 1.0, %v1521
  %v1523 = vrcp.pop %v1520
  %v1524 = vmul.f32 1.0, %v1523
  %v1525 = vtanh.pop %v1511
  %v1526 = vtanh.pop %v1512
  %v1529 = vrot.slane %v1301, 7
  %v1530 = vrot.slane %v1302, 7
  %v1533 = vmul.f32 %v1522, %v1529
  %v1534 = vmul.f32 %v1524, %v1530
  %1537 = vrot.lane.b32.xlu0 %v1525, 64
  %v1538 = vpop.permute.xlu0 %1537
  %1539 = vrot.lane.b32.xlu0 %v1526, 64
  %v1540 = vpop.permute.xlu0 %1539
  %v1543 = vmul.f32 %v1522, %v1538
  %v1544 = vmul.f32 %v1524, %v1540
  %1547 = vrot.lane.b32.xlu0 %v1543, 32
  %v1548 = vpop.permute.xlu0 %1547
  %1549 = vrot.lane.b32.xlu0 %v1544, 32
  %v1550 = vpop.permute.xlu0 %1549
  %v1553 = vadd.f32 %v1533, %v1548
  %v1554 = vadd.f32 %v1534, %v1550
  %v1555 = vtanh.pop %v1553
  %v1556 = vtanh.pop %v1554
  %1559 = vrot.lane.b32.xlu0 %v1555, 64
  %v1560 = vpop.permute.xlu0 %1559
  %1561 = vrot.lane.b32.xlu0 %v1556, 64
  %v1562 = vpop.permute.xlu0 %1561
  %v1565 = vmul.f32 %v1522, %v1560
  %v1566 = vmul.f32 %v1524, %v1562
  %v1569 = vrot.slane %v1565, 5
  %v1570 = vrot.slane %v1566, 4
  %v1571 = vsel %vm315, %v1570, %v1569
  %1572 = vrot.lane.b32.xlu0 %v1571, 32
  %v1573 = vpop.permute.xlu0 %1572
  %v1574 = vsel %vm173, %v1573, 0
  %1576 = vmatprep.subr.mxu0 0.0
  %1577 = vmatpush1.msra.mxu0 0.0
  %1578 = vmatprep.subr.mxu0 0.0
  %1579 = vmatpush1.msra.mxu0 0.0
  %1580 = vmatprep.subr.mxu0 0.0
  %1581 = vmatpush1.msra.mxu0 0.0
  %1582 = vmatprep.subr.mxu0 0.0
  %1583 = vmatpush1.msra.mxu0 0.0
  %1584 = vmatprep.subr.mxu0 0.0
  %1585 = vmatpush1.msra.mxu0 0.0
  %1586 = vmatprep.subr.mxu0 0.0
  %1587 = vmatpush1.msra.mxu0 0.0
  %1588 = vmatprep.subr.mxu0 0.0
  %1589 = vmatpush1.msra.mxu0 0.0
  %1590 = vmatprep.subr.mxu0 0.0
  %1591 = vmatpush1.msra.mxu0 0.0
  %1592 = vmatprep.subr.mxu0 0.0
  %1593 = vmatpush1.msra.mxu0 0.0
  %1594 = vmatprep.subr.mxu0 0.0
  %1595 = vmatpush1.msra.mxu0 0.0
  %1596 = vmatprep.subr.mxu0 0.0
  %1597 = vmatpush1.msra.mxu0 0.0
  %1598 = vmatprep.subr.mxu0 0.0
  %1599 = vmatpush1.msra.mxu0 0.0
  %1600 = vmatprep.subr.mxu0 0.0
  %1601 = vmatpush1.msra.mxu0 %v155
  %1602 = vmatprep.subr.mxu0 0.0
  %1603 = vmatpush1.msra.mxu0 %v154
  %1604 = vmatprep.subr.mxu0 0.0
  %1605 = vmatpush1.msra.mxu0 %v153
  %1606 = vmatprep.subr.mxu0 0.0
  %1607 = vmatpush1.msra.mxu0 %v152
  %1608 = vmatprep.subr.mxu0 0.0
  %1609 = vmatpush2.msra.mxu0 0.0
  %1610 = vmatprep.subr.mxu0 0.0
  %1611 = vmatpush2.msra.mxu0 0.0
  %1612 = vmatprep.subr.mxu0 0.0
  %1613 = vmatpush2.msra.mxu0 0.0
  %1614 = vmatprep.subr.mxu0 0.0
  %1615 = vmatpush2.msra.mxu0 0.0
  %1616 = vmatprep.subr.mxu0 0.0
  %1617 = vmatpush2.msra.mxu0 0.0
  %1618 = vmatprep.subr.mxu0 0.0
  %1619 = vmatpush2.msra.mxu0 0.0
  %1620 = vmatprep.subr.mxu0 0.0
  %1621 = vmatpush2.msra.mxu0 0.0
  %1622 = vmatprep.subr.mxu0 0.0
  %1623 = vmatpush2.msra.mxu0 0.0
  %1624 = vmatprep.subr.mxu0 0.0
  %1625 = vmatpush2.msra.mxu0 0.0
  %1626 = vmatprep.subr.mxu0 0.0
  %1627 = vmatpush2.msra.mxu0 0.0
  %1628 = vmatprep.subr.mxu0 0.0
  %1629 = vmatpush2.msra.mxu0 0.0
  %1630 = vmatprep.subr.mxu0 0.0
  %1631 = vmatpush2.msra.mxu0 0.0
  %1632 = vmatprep.subr.mxu0 0.0
  %1633 = vmatpush2.msra.mxu0 0.0
  %1634 = vmatprep.subr.mxu0 0.0
  %1635 = vmatpush2.msra.mxu0 0.0
  %1636 = vmatprep.subr.mxu0 0.0
  %1637 = vmatpush2.msra.mxu0 0.0
  %1638 = vmatprep.subr.mxu0 0.0
  %1639 = vmatpush2.msra.mxu0 0.0
  %1640 = vmatprep.mubr.f32.mxu0 0.0
  %1641 = vmatmul.mubr.f32.gmra.mxu0 %v1574
  %v1642 = vpop.f32.mrf.mxu0
  %v1643 = vadd.f32 %v1504, %v1642
  %v1644 = vpop.f32.mrf.mxu0
  %1645 = vdwg.mxu0
  %v1646 = vadd.f32 %v1643, %v161
  %v1647 = vxor.u32 %v1646, 2147483648
  %v1648 = vmul.f32 %v1647, 1.442695
  %v1649 = vpow.pop %v1648
  %v1650 = vadd.f32 %v1649, 1.0
  %v1651 = vrcp.pop %v1650
  %v1652 = vmul.f32 1.0, %v1651
  %v1653 = vtanh.pop %v1646
  %v1654 = vmul.f32 %v1652, %v1412
  %1656 = vrot.lane.b32.xlu0 %v1653, 64
  %v1657 = vpop.permute.xlu0 %1656
  %v1659 = vmul.f32 %v1652, %v1657
  %1661 = vrot.lane.b32.xlu0 %v1659, 32
  %v1662 = vpop.permute.xlu0 %1661
  %v1664 = vadd.f32 %v1654, %v1662
  %v1665 = vtanh.pop %v1664
  %1667 = vrot.lane.b32.xlu0 %v1665, 64
  %v1668 = vpop.permute.xlu0 %1667
  %v1670 = vmul.f32 %v1652, %v1668
  %v1671 = vrot.slane %v1566, 7
  %vm1672 = vcmask 1046534
  %v1673 = vsel %vm1672, %v1671, %v1565
  %1674 = vrot.lane.b32.xlu0 %v1673, 32
  %v1675 = vpop.permute.xlu0 %1674
  %v1678 = vrot.slane %v1670, 3
  %1679 = vrot.lane.b32.xlu0 %v1678, 64
  %v1680 = vpop.permute.xlu0 %1679
  %v1682 = vsel %vm173, %v1675, %v1680
  %v1684 = vrot.slane %v1682, 5
  %v1685 = vsel %vm175, %v1684, 0
  %1687 = vmatprep.subr.mxu0 0.0
  %1688 = vmatpush1.msra.mxu0 0.0
  %1689 = vmatprep.subr.mxu0 0.0
  %1690 = vmatpush1.msra.mxu0 0.0
  %1691 = vmatprep.subr.mxu0 0.0
  %1692 = vmatpush1.msra.mxu0 0.0
  %1693 = vmatprep.subr.mxu0 0.0
  %1694 = vmatpush1.msra.mxu0 0.0
  %1695 = vmatprep.subr.mxu0 0.0
  %1696 = vmatpush1.msra.mxu0 0.0
  %1697 = vmatprep.subr.mxu0 0.0
  %1698 = vmatpush1.msra.mxu0 0.0
  %1699 = vmatprep.subr.mxu0 0.0
  %1700 = vmatpush1.msra.mxu0 0.0
  %1701 = vmatprep.subr.mxu0 0.0
  %1702 = vmatpush1.msra.mxu0 0.0
  %1703 = vmatprep.subr.mxu0 %v151
  %1704 = vmatpush1.msra.mxu0 %v150
  %1705 = vmatprep.subr.mxu0 %v149
  %1706 = vmatpush1.msra.mxu0 %v148
  %1707 = vmatprep.subr.mxu0 %v147
  %1708 = vmatpush1.msra.mxu0 %v146
  %1709 = vmatprep.subr.mxu0 %v145
  %1710 = vmatpush1.msra.mxu0 %v144
  %1711 = vmatprep.subr.mxu0 %v143
  %1712 = vmatpush1.msra.mxu0 %v142
  %1713 = vmatprep.subr.mxu0 %v141
  %1714 = vmatpush1.msra.mxu0 %v140
  %1715 = vmatprep.subr.mxu0 %v139
  %1716 = vmatpush1.msra.mxu0 %v138
  %1717 = vmatprep.subr.mxu0 %v137
  %1718 = vmatpush1.msra.mxu0 %v136
  %1719 = vmatprep.subr.mxu0 0.0
  %1720 = vmatpush2.msra.mxu0 0.0
  %1721 = vmatprep.subr.mxu0 0.0
  %1722 = vmatpush2.msra.mxu0 0.0
  %1723 = vmatprep.subr.mxu0 0.0
  %1724 = vmatpush2.msra.mxu0 0.0
  %1725 = vmatprep.subr.mxu0 0.0
  %1726 = vmatpush2.msra.mxu0 0.0
  %1727 = vmatprep.subr.mxu0 0.0
  %1728 = vmatpush2.msra.mxu0 0.0
  %1729 = vmatprep.subr.mxu0 0.0
  %1730 = vmatpush2.msra.mxu0 0.0
  %1731 = vmatprep.subr.mxu0 0.0
  %1732 = vmatpush2.msra.mxu0 0.0
  %1733 = vmatprep.subr.mxu0 0.0
  %1734 = vmatpush2.msra.mxu0 0.0
  %1735 = vmatprep.subr.mxu0 0.0
  %1736 = vmatpush2.msra.mxu0 0.0
  %1737 = vmatprep.subr.mxu0 0.0
  %1738 = vmatpush2.msra.mxu0 0.0
  %1739 = vmatprep.subr.mxu0 0.0
  %1740 = vmatpush2.msra.mxu0 0.0
  %1741 = vmatprep.subr.mxu0 0.0
  %1742 = vmatpush2.msra.mxu0 0.0
  %1743 = vmatprep.subr.mxu0 0.0
  %1744 = vmatpush2.msra.mxu0 0.0
  %1745 = vmatprep.subr.mxu0 0.0
  %1746 = vmatpush2.msra.mxu0 0.0
  %1747 = vmatprep.subr.mxu0 0.0
  %1748 = vmatpush2.msra.mxu0 0.0
  %1749 = vmatprep.subr.mxu0 0.0
  %1750 = vmatpush2.msra.mxu0 0.0
  %1751 = vmatprep.mubr.f32.mxu0 0.0
  %1752 = vmatmul.mubr.f32.gmra.mxu0 %v1685
  %v1753 = vpop.f32.mrf.mxu0
  %v1754 = vadd.f32 0.0, %v1753
  %v1755 = vpop.f32.mrf.mxu0
  %v1756 = vadd.f32 0.0, %v1755
  %1757 = vdwg.mxu0
  %v1759 = vrot.slane %v1754, 2
  %v1760 = vrot.slane %v1754, 3
  %v1763 = vadd.f32 %v128, %v1759
  %v1764 = vadd.f32 %v133, %v1760
  %v1765 = vxor.u32 %v1763, 2147483648
  %v1766 = vxor.u32 %v1764, 2147483648
  %v1767 = vmul.f32 %v1765, 1.442695
  %v1768 = vpow.pop %v1767
  %v1769 = vmul.f32 %v1766, 1.442695
  %v1770 = vpow.pop %v1769
  %v1771 = vadd.f32 %v1768, 1.0
  %v1772 = vadd.f32 %v1770, 1.0
  %v1773 = vrcp.pop %v1771
  %v1774 = vmul.f32 1.0, %v1773
  %v1775 = vrcp.pop %v1772
  %v1776 = vmul.f32 1.0, %v1775
  %v1777 = vtanh.pop %v1763
  %v1778 = vtanh.pop %v1764
  %v1781 = vrot.slane %v1553, 7
  %v1782 = vrot.slane %v1554, 7
  %v1785 = vmul.f32 %v1774, %v1781
  %v1786 = vmul.f32 %v1776, %v1782
  %1789 = vrot.lane.b32.xlu0 %v1777, 64
  %v1790 = vpop.permute.xlu0 %1789
  %1791 = vrot.lane.b32.xlu0 %v1778, 64
  %v1792 = vpop.permute.xlu0 %1791
  %v1795 = vmul.f32 %v1774, %v1790
  %v1796 = vmul.f32 %v1776, %v1792
  %1799 = vrot.lane.b32.xlu0 %v1795, 32
  %v1800 = vpop.permute.xlu0 %1799
  %1801 = vrot.lane.b32.xlu0 %v1796, 32
  %v1802 = vpop.permute.xlu0 %1801
  %v1805 = vadd.f32 %v1785, %v1800
  %v1806 = vadd.f32 %v1786, %v1802
  %v1807 = vtanh.pop %v1805
  %v1808 = vtanh.pop %v1806
  %1811 = vrot.lane.b32.xlu0 %v1807, 64
  %v1812 = vpop.permute.xlu0 %1811
  %1813 = vrot.lane.b32.xlu0 %v1808, 64
  %v1814 = vpop.permute.xlu0 %1813
  %v1817 = vmul.f32 %v1774, %v1812
  %v1818 = vmul.f32 %v1776, %v1814
  %v1821 = vrot.slane %v1817, 6
  %v1822 = vrot.slane %v1818, 5
  %v1823 = vsel %vm315, %v1822, %v1821
  %1824 = vrot.lane.b32.xlu0 %v1823, 32
  %v1825 = vpop.permute.xlu0 %1824
  %v1826 = vsel %vm173, %v1825, 0
  %1828 = vmatprep.subr.mxu0 0.0
  %1829 = vmatpush1.msra.mxu0 0.0
  %1830 = vmatprep.subr.mxu0 0.0
  %1831 = vmatpush1.msra.mxu0 0.0
  %1832 = vmatprep.subr.mxu0 0.0
  %1833 = vmatpush1.msra.mxu0 0.0
  %1834 = vmatprep.subr.mxu0 0.0
  %1835 = vmatpush1.msra.mxu0 0.0
  %1836 = vmatprep.subr.mxu0 0.0
  %1837 = vmatpush1.msra.mxu0 0.0
  %1838 = vmatprep.subr.mxu0 0.0
  %1839 = vmatpush1.msra.mxu0 0.0
  %1840 = vmatprep.subr.mxu0 0.0
  %1841 = vmatpush1.msra.mxu0 0.0
  %1842 = vmatprep.subr.mxu0 0.0
  %1843 = vmatpush1.msra.mxu0 0.0
  %1844 = vmatprep.subr.mxu0 0.0
  %1845 = vmatpush1.msra.mxu0 0.0
  %1846 = vmatprep.subr.mxu0 0.0
  %1847 = vmatpush1.msra.mxu0 0.0
  %1848 = vmatprep.subr.mxu0 0.0
  %1849 = vmatpush1.msra.mxu0 0.0
  %1850 = vmatprep.subr.mxu0 0.0
  %1851 = vmatpush1.msra.mxu0 0.0
  %1852 = vmatprep.subr.mxu0 0.0
  %1853 = vmatpush1.msra.mxu0 %v155
  %1854 = vmatprep.subr.mxu0 0.0
  %1855 = vmatpush1.msra.mxu0 %v154
  %1856 = vmatprep.subr.mxu0 0.0
  %1857 = vmatpush1.msra.mxu0 %v153
  %1858 = vmatprep.subr.mxu0 0.0
  %1859 = vmatpush1.msra.mxu0 %v152
  %1860 = vmatprep.subr.mxu0 0.0
  %1861 = vmatpush2.msra.mxu0 0.0
  %1862 = vmatprep.subr.mxu0 0.0
  %1863 = vmatpush2.msra.mxu0 0.0
  %1864 = vmatprep.subr.mxu0 0.0
  %1865 = vmatpush2.msra.mxu0 0.0
  %1866 = vmatprep.subr.mxu0 0.0
  %1867 = vmatpush2.msra.mxu0 0.0
  %1868 = vmatprep.subr.mxu0 0.0
  %1869 = vmatpush2.msra.mxu0 0.0
  %1870 = vmatprep.subr.mxu0 0.0
  %1871 = vmatpush2.msra.mxu0 0.0
  %1872 = vmatprep.subr.mxu0 0.0
  %1873 = vmatpush2.msra.mxu0 0.0
  %1874 = vmatprep.subr.mxu0 0.0
  %1875 = vmatpush2.msra.mxu0 0.0
  %1876 = vmatprep.subr.mxu0 0.0
  %1877 = vmatpush2.msra.mxu0 0.0
  %1878 = vmatprep.subr.mxu0 0.0
  %1879 = vmatpush2.msra.mxu0 0.0
  %1880 = vmatprep.subr.mxu0 0.0
  %1881 = vmatpush2.msra.mxu0 0.0
  %1882 = vmatprep.subr.mxu0 0.0
  %1883 = vmatpush2.msra.mxu0 0.0
  %1884 = vmatprep.subr.mxu0 0.0
  %1885 = vmatpush2.msra.mxu0 0.0
  %1886 = vmatprep.subr.mxu0 0.0
  %1887 = vmatpush2.msra.mxu0 0.0
  %1888 = vmatprep.subr.mxu0 0.0
  %1889 = vmatpush2.msra.mxu0 0.0
  %1890 = vmatprep.subr.mxu0 0.0
  %1891 = vmatpush2.msra.mxu0 0.0
  %1892 = vmatprep.mubr.f32.mxu0 0.0
  %1893 = vmatmul.mubr.f32.gmra.mxu0 %v1826
  %v1894 = vpop.f32.mrf.mxu0
  %v1895 = vadd.f32 %v1756, %v1894
  %v1896 = vpop.f32.mrf.mxu0
  %1897 = vdwg.mxu0
  %v1898 = vadd.f32 %v1895, %v161
  %v1899 = vxor.u32 %v1898, 2147483648
  %v1900 = vmul.f32 %v1899, 1.442695
  %v1901 = vpow.pop %v1900
  %v1902 = vadd.f32 %v1901, 1.0
  %v1903 = vrcp.pop %v1902
  %v1904 = vmul.f32 1.0, %v1903
  %v1905 = vtanh.pop %v1898
  %v1906 = vmul.f32 %v1904, %v1664
  %1908 = vrot.lane.b32.xlu0 %v1905, 64
  %v1909 = vpop.permute.xlu0 %1908
  %v1911 = vmul.f32 %v1904, %v1909
  %1913 = vrot.lane.b32.xlu0 %v1911, 32
  %v1914 = vpop.permute.xlu0 %1913
  %v1916 = vadd.f32 %v1906, %v1914
  %v1917 = vtanh.pop %v1916
  %1919 = vrot.lane.b32.xlu0 %v1917, 64
  %v1920 = vpop.permute.xlu0 %1919
  %v1922 = vmul.f32 %v1904, %v1920
  %v1923 = vrot.slane %v1818, 7
  %vm1924 = vcmask 1047559
  %v1925 = vsel %vm1924, %v1923, %v1817
  %1926 = vrot.lane.b32.xlu0 %v1925, 32
  %v1927 = vpop.permute.xlu0 %1926
  %v1930 = vrot.slane %v1922, 2
  %1931 = vrot.lane.b32.xlu0 %v1930, 64
  %v1932 = vpop.permute.xlu0 %1931
  %v1934 = vsel %vm173, %v1927, %v1932
  %v1936 = vrot.slane %v1934, 6
  %v1937 = vsel %vm175, %v1936, 0
  %1939 = vmatprep.subr.mxu0 0.0
  %1940 = vmatpush1.msra.mxu0 0.0
  %1941 = vmatprep.subr.mxu0 0.0
  %1942 = vmatpush1.msra.mxu0 0.0
  %1943 = vmatprep.subr.mxu0 0.0
  %1944 = vmatpush1.msra.mxu0 0.0
  %1945 = vmatprep.subr.mxu0 0.0
  %1946 = vmatpush1.msra.mxu0 0.0
  %1947 = vmatprep.subr.mxu0 0.0
  %1948 = vmatpush1.msra.mxu0 0.0
  %1949 = vmatprep.subr.mxu0 0.0
  %1950 = vmatpush1.msra.mxu0 0.0
  %1951 = vmatprep.subr.mxu0 0.0
  %1952 = vmatpush1.msra.mxu0 0.0
  %1953 = vmatprep.subr.mxu0 0.0
  %1954 = vmatpush1.msra.mxu0 0.0
  %1955 = vmatprep.subr.mxu0 %v151
  %1956 = vmatpush1.msra.mxu0 %v150
  %1957 = vmatprep.subr.mxu0 %v149
  %1958 = vmatpush1.msra.mxu0 %v148
  %1959 = vmatprep.subr.mxu0 %v147
  %1960 = vmatpush1.msra.mxu0 %v146
  %1961 = vmatprep.subr.mxu0 %v145
  %1962 = vmatpush1.msra.mxu0 %v144
  %1963 = vmatprep.subr.mxu0 %v143
  %1964 = vmatpush1.msra.mxu0 %v142
  %1965 = vmatprep.subr.mxu0 %v141
  %1966 = vmatpush1.msra.mxu0 %v140
  %1967 = vmatprep.subr.mxu0 %v139
  %1968 = vmatpush1.msra.mxu0 %v138
  %1969 = vmatprep.subr.mxu0 %v137
  %1970 = vmatpush1.msra.mxu0 %v136
  %1971 = vmatprep.subr.mxu0 0.0
  %1972 = vmatpush2.msra.mxu0 0.0
  %1973 = vmatprep.subr.mxu0 0.0
  %1974 = vmatpush2.msra.mxu0 0.0
  %1975 = vmatprep.subr.mxu0 0.0
  %1976 = vmatpush2.msra.mxu0 0.0
  %1977 = vmatprep.subr.mxu0 0.0
  %1978 = vmatpush2.msra.mxu0 0.0
  %1979 = vmatprep.subr.mxu0 0.0
  %1980 = vmatpush2.msra.mxu0 0.0
  %1981 = vmatprep.subr.mxu0 0.0
  %1982 = vmatpush2.msra.mxu0 0.0
  %1983 = vmatprep.subr.mxu0 0.0
  %1984 = vmatpush2.msra.mxu0 0.0
  %1985 = vmatprep.subr.mxu0 0.0
  %1986 = vmatpush2.msra.mxu0 0.0
  %1987 = vmatprep.subr.mxu0 0.0
  %1988 = vmatpush2.msra.mxu0 0.0
  %1989 = vmatprep.subr.mxu0 0.0
  %1990 = vmatpush2.msra.mxu0 0.0
  %1991 = vmatprep.subr.mxu0 0.0
  %1992 = vmatpush2.msra.mxu0 0.0
  %1993 = vmatprep.subr.mxu0 0.0
  %1994 = vmatpush2.msra.mxu0 0.0
  %1995 = vmatprep.subr.mxu0 0.0
  %1996 = vmatpush2.msra.mxu0 0.0
  %1997 = vmatprep.subr.mxu0 0.0
  %1998 = vmatpush2.msra.mxu0 0.0
  %1999 = vmatprep.subr.mxu0 0.0
  %2000 = vmatpush2.msra.mxu0 0.0
  %2001 = vmatprep.subr.mxu0 0.0
  %2002 = vmatpush2.msra.mxu0 0.0
  %2003 = vmatprep.mubr.f32.mxu0 0.0
  %2004 = vmatmul.mubr.f32.gmra.mxu0 %v1937
  %v2005 = vpop.f32.mrf.mxu0
  %v2006 = vadd.f32 0.0, %v2005
  %v2007 = vpop.f32.mrf.mxu0
  %v2008 = vadd.f32 0.0, %v2007
  %2009 = vdwg.mxu0
  %v2011 = vrot.slane %v2006, 1
  %v2012 = vrot.slane %v2006, 2
  %v2015 = vadd.f32 %v128, %v2011
  %v2016 = vadd.f32 %v133, %v2012
  %v2017 = vxor.u32 %v2015, 2147483648
  %v2018 = vxor.u32 %v2016, 2147483648
  %v2019 = vmul.f32 %v2017, 1.442695
  %v2020 = vpow.pop %v2019
  %v2021 = vmul.f32 %v2018, 1.442695
  %v2022 = vpow.pop %v2021
  %v2023 = vadd.f32 %v2020, 1.0
  %v2024 = vadd.f32 %v2022, 1.0
  %v2025 = vrcp.pop %v2023
  %v2026 = vmul.f32 1.0, %v2025
  %v2027 = vrcp.pop %v2024
  %v2028 = vmul.f32 1.0, %v2027
  %v2029 = vtanh.pop %v2015
  %v2030 = vtanh.pop %v2016
  %v2033 = vrot.slane %v1805, 7
  %v2034 = vrot.slane %v1806, 7
  %v2037 = vmul.f32 %v2026, %v2033
  %v2038 = vmul.f32 %v2028, %v2034
  %2041 = vrot.lane.b32.xlu0 %v2029, 64
  %v2042 = vpop.permute.xlu0 %2041
  %2043 = vrot.lane.b32.xlu0 %v2030, 64
  %v2044 = vpop.permute.xlu0 %2043
  %v2047 = vmul.f32 %v2026, %v2042
  %v2048 = vmul.f32 %v2028, %v2044
  %2051 = vrot.lane.b32.xlu0 %v2047, 32
  %v2052 = vpop.permute.xlu0 %2051
  %2053 = vrot.lane.b32.xlu0 %v2048, 32
  %v2054 = vpop.permute.xlu0 %2053
  %v2057 = vadd.f32 %v2037, %v2052
  %v2058 = vadd.f32 %v2038, %v2054
  %v2059 = vtanh.pop %v2057
  %v2060 = vtanh.pop %v2058
  %2063 = vrot.lane.b32.xlu0 %v2059, 64
  %v2064 = vpop.permute.xlu0 %2063
  %2065 = vrot.lane.b32.xlu0 %v2060, 64
  %v2066 = vpop.permute.xlu0 %2065
  %v2069 = vmul.f32 %v2026, %v2064
  %v2070 = vmul.f32 %v2028, %v2066
  %v2073 = vrot.slane %v2069, 7
  %v2074 = vrot.slane %v2070, 6
  %v2075 = vsel %vm315, %v2074, %v2073
  %2076 = vrot.lane.b32.xlu0 %v2075, 32
  %v2077 = vpop.permute.xlu0 %2076
  %v2078 = vsel %vm173, %v2077, 0
  %2080 = vmatprep.subr.mxu0 0.0
  %2081 = vmatpush1.msra.mxu0 0.0
  %2082 = vmatprep.subr.mxu0 0.0
  %2083 = vmatpush1.msra.mxu0 0.0
  %2084 = vmatprep.subr.mxu0 0.0
  %2085 = vmatpush1.msra.mxu0 0.0
  %2086 = vmatprep.subr.mxu0 0.0
  %2087 = vmatpush1.msra.mxu0 0.0
  %2088 = vmatprep.subr.mxu0 0.0
  %2089 = vmatpush1.msra.mxu0 0.0
  %2090 = vmatprep.subr.mxu0 0.0
  %2091 = vmatpush1.msra.mxu0 0.0
  %2092 = vmatprep.subr.mxu0 0.0
  %2093 = vmatpush1.msra.mxu0 0.0
  %2094 = vmatprep.subr.mxu0 0.0
  %2095 = vmatpush1.msra.mxu0 0.0
  %2096 = vmatprep.subr.mxu0 0.0
  %2097 = vmatpush1.msra.mxu0 0.0
  %2098 = vmatprep.subr.mxu0 0.0
  %2099 = vmatpush1.msra.mxu0 0.0
  %2100 = vmatprep.subr.mxu0 0.0
  %2101 = vmatpush1.msra.mxu0 0.0
  %2102 = vmatprep.subr.mxu0 0.0
  %2103 = vmatpush1.msra.mxu0 0.0
  %2104 = vmatprep.subr.mxu0 0.0
  %2105 = vmatpush1.msra.mxu0 %v155
  %2106 = vmatprep.subr.mxu0 0.0
  %2107 = vmatpush1.msra.mxu0 %v154
  %2108 = vmatprep.subr.mxu0 0.0
  %2109 = vmatpush1.msra.mxu0 %v153
  %2110 = vmatprep.subr.mxu0 0.0
  %2111 = vmatpush1.msra.mxu0 %v152
  %2112 = vmatprep.subr.mxu0 0.0
  %2113 = vmatpush2.msra.mxu0 0.0
  %2114 = vmatprep.subr.mxu0 0.0
  %2115 = vmatpush2.msra.mxu0 0.0
  %2116 = vmatprep.subr.mxu0 0.0
  %2117 = vmatpush2.msra.mxu0 0.0
  %2118 = vmatprep.subr.mxu0 0.0
  %2119 = vmatpush2.msra.mxu0 0.0
  %2120 = vmatprep.subr.mxu0 0.0
  %2121 = vmatpush2.msra.mxu0 0.0
  %2122 = vmatprep.subr.mxu0 0.0
  %2123 = vmatpush2.msra.mxu0 0.0
  %2124 = vmatprep.subr.mxu0 0.0
  %2125 = vmatpush2.msra.mxu0 0.0
  %2126 = vmatprep.subr.mxu0 0.0
  %2127 = vmatpush2.msra.mxu0 0.0
  %2128 = vmatprep.subr.mxu0 0.0
  %2129 = vmatpush2.msra.mxu0 0.0
  %2130 = vmatprep.subr.mxu0 0.0
  %2131 = vmatpush2.msra.mxu0 0.0
  %2132 = vmatprep.subr.mxu0 0.0
  %2133 = vmatpush2.msra.mxu0 0.0
  %2134 = vmatprep.subr.mxu0 0.0
  %2135 = vmatpush2.msra.mxu0 0.0
  %2136 = vmatprep.subr.mxu0 0.0
  %2137 = vmatpush2.msra.mxu0 0.0
  %2138 = vmatprep.subr.mxu0 0.0
  %2139 = vmatpush2.msra.mxu0 0.0
  %2140 = vmatprep.subr.mxu0 0.0
  %2141 = vmatpush2.msra.mxu0 0.0
  %2142 = vmatprep.subr.mxu0 0.0
  %2143 = vmatpush2.msra.mxu0 0.0
  %2144 = vmatprep.mubr.f32.mxu0 0.0
  %2145 = vmatmul.mubr.f32.gmra.mxu0 %v2078
  %v2146 = vpop.f32.mrf.mxu0
  %v2147 = vadd.f32 %v2008, %v2146
  %v2148 = vpop.f32.mrf.mxu0
  %2149 = vdwg.mxu0
  %v2150 = vadd.f32 %v2147, %v161
  %v2151 = vxor.u32 %v2150, 2147483648
  %v2152 = vmul.f32 %v2151, 1.442695
  %v2153 = vpow.pop %v2152
  %v2154 = vadd.f32 %v2153, 1.0
  %v2155 = vrcp.pop %v2154
  %v2156 = vmul.f32 1.0, %v2155
  %v2157 = vtanh.pop %v2150
  %v2158 = vmul.f32 %v2156, %v1916
  %2160 = vrot.lane.b32.xlu0 %v2157, 64
  %v2161 = vpop.permute.xlu0 %2160
  %v2163 = vmul.f32 %v2156, %v2161
  %2165 = vrot.lane.b32.xlu0 %v2163, 32
  %v2166 = vpop.permute.xlu0 %2165
  %v2168 = vadd.f32 %v2158, %v2166
  %v2169 = vtanh.pop %v2168
  %2171 = vrot.lane.b32.xlu0 %v2169, 64
  %v2172 = vpop.permute.xlu0 %2171
  %v2174 = vmul.f32 %v2156, %v2172
  %v2175 = vrot.slane %v2070, 7
  %2176 = vrot.lane.b32.xlu0 %v2069, 32
  %v2177 = vpop.permute.xlu0 %2176
  %2178 = vrot.lane.b32.xlu0 %v2175, 32
  %v2179 = vpop.permute.xlu0 %2178
  %vm2182 = vcmask 261127
  %2183 = vst.msk [vmem:[%s11 - $0x7] sm:$0x80] %vm2182, %v2177
  %vm2184 = vcmask 253952
  %2185 = vst.msk [vmem:[%s11 + $0x1] sm:$0x1] %vm2184, %v2179
  %2187 = vrot.lane.b32.xlu0 %v2174, 32
  %v2188 = vpop.permute.xlu0 %2187
  %s2190 = scalar_lea.vmem %s11, 2
  %vm2191 = vcmask 254976
  %2192 = vst.msk [vmem:[%s2190] sm:$0x3] %vm2191, %v2188
  %v2195 = vrot.slane %v2058, 7
  %2196 = vrot.lane.b32.xlu0 %v2057, 96
  %v2197 = vpop.permute.xlu0 %2196
  %2198 = vrot.lane.b32.xlu0 %v2195, 96
  %v2199 = vpop.permute.xlu0 %2198
  %2202 = vst.msk [vmem:[%s12 - $0x7] sm:$0x80] %vm2182, %v2197
  %2203 = vst.msk [vmem:[%s12 + $0x1] sm:$0x1] %vm2184, %v2199
  %2205 = vrot.lane.b32.xlu0 %v2168, 96
  %v2206 = vpop.permute.xlu0 %2205
  %s2208 = scalar_lea.vmem %s12, 2
  %2209 = vst.msk [vmem:[%s2208] sm:$0x3] %vm2191, %v2206
  %v2210 = vmax.f32 %v2174, 0.0
  %v2211 = vld [vmem:[%s8] sm:$0xff]
  %v2212 = vld [vmem:[%s8 + $0x8] sm:$0xff]
  %v2213 = vld [vmem:[%s8 + $0x10] sm:$0xff]
  %v2214 = vld [vmem:[%s8 + $0x18] sm:$0xff]
  %v2215 = vld [vmem:[#allocation2] sm:$0x1]
  %v2217 = vlaneseq
  %v2218 = vshrl.u32 %v2217, 7
  %v2219 = vsub.s32 0, %v2218
  %v2220 = vrot.slane %v2215, %v2219
  %2223 = vrot.lane.b32.xlu0 %v2210, 32
  %v2224 = vpop.permute.xlu0 %2223
  %v2225 = vsel %vm173, %v2224, 0
  %2227 = vmatprep.subr.mxu0 0.0
  %2228 = vmatpush1.msra.mxu0 0.0
  %2229 = vmatprep.subr.mxu0 0.0
  %2230 = vmatpush1.msra.mxu0 0.0
  %2231 = vmatprep.subr.mxu0 0.0
  %2232 = vmatpush1.msra.mxu0 0.0
  %2233 = vmatprep.subr.mxu0 0.0
  %2234 = vmatpush1.msra.mxu0 0.0
  %2235 = vmatprep.subr.mxu0 0.0
  %2236 = vmatpush1.msra.mxu0 0.0
  %2237 = vmatprep.subr.mxu0 0.0
  %2238 = vmatpush1.msra.mxu0 0.0
  %2239 = vmatprep.subr.mxu0 0.0
  %2240 = vmatpush1.msra.mxu0 0.0
  %2241 = vmatprep.subr.mxu0 0.0
  %2242 = vmatpush1.msra.mxu0 0.0
  %2243 = vmatprep.subr.mxu0 0.0
  %2244 = vmatpush1.msra.mxu0 0.0
  %2245 = vmatprep.subr.mxu0 0.0
  %2246 = vmatpush1.msra.mxu0 0.0
  %2247 = vmatprep.subr.mxu0 0.0
  %2248 = vmatpush1.msra.mxu0 0.0
  %2249 = vmatprep.subr.mxu0 0.0
  %2250 = vmatpush1.msra.mxu0 0.0
  %2251 = vmatprep.subr.mxu0 0.0
  %2252 = vmatpush1.msra.mxu0 %v2214
  %2253 = vmatprep.subr.mxu0 0.0
  %2254 = vmatpush1.msra.mxu0 %v2213
  %2255 = vmatprep.subr.mxu0 0.0
  %2256 = vmatpush1.msra.mxu0 %v2212
  %2257 = vmatprep.subr.mxu0 0.0
  %2258 = vmatpush1.msra.mxu0 %v2211
  %2259 = vmatprep.subr.mxu0 0.0
  %2260 = vmatpush2.msra.mxu0 0.0
  %2261 = vmatprep.subr.mxu0 0.0
  %2262 = vmatpush2.msra.mxu0 0.0
  %2263 = vmatprep.subr.mxu0 0.0
  %2264 = vmatpush2.msra.mxu0 0.0
  %2265 = vmatprep.subr.mxu0 0.0
  %2266 = vmatpush2.msra.mxu0 0.0
  %2267 = vmatprep.subr.mxu0 0.0
  %2268 = vmatpush2.msra.mxu0 0.0
  %2269 = vmatprep.subr.mxu0 0.0
  %2270 = vmatpush2.msra.mxu0 0.0
  %2271 = vmatprep.subr.mxu0 0.0
  %2272 = vmatpush2.msra.mxu0 0.0
  %2273 = vmatprep.subr.mxu0 0.0
  %2274 = vmatpush2.msra.mxu0 0.0
  %2275 = vmatprep.subr.mxu0 0.0
  %2276 = vmatpush2.msra.mxu0 0.0
  %2277 = vmatprep.subr.mxu0 0.0
  %2278 = vmatpush2.msra.mxu0 0.0
  %2279 = vmatprep.subr.mxu0 0.0
  %2280 = vmatpush2.msra.mxu0 0.0
  %2281 = vmatprep.subr.mxu0 0.0
  %2282 = vmatpush2.msra.mxu0 0.0
  %2283 = vmatprep.subr.mxu0 0.0
  %2284 = vmatpush2.msra.mxu0 0.0
  %2285 = vmatprep.subr.mxu0 0.0
  %2286 = vmatpush2.msra.mxu0 0.0
  %2287 = vmatprep.subr.mxu0 0.0
  %2288 = vmatpush2.msra.mxu0 0.0
  %2289 = vmatprep.subr.mxu0 0.0
  %2290 = vmatpush2.msra.mxu0 0.0
  %2291 = vmatprep.mubr.f32.mxu0 0.0
  %2292 = vmatmul.mubr.f32.gmra.mxu0 %v2225
  %v2293 = vpop.f32.mrf.mxu0
  %v2294 = vadd.f32 %v2220, %v2293
  %v2295 = vpop.f32.mrf.mxu0
  %2296 = vdwg.mxu0
  %vm2297 = vcmask 1024
  %2298 = vst.msk [vmem:[%s10] sm:$0x3] %vm2297, %v2294
  // Predicated region
  $region42: #{lstm_net_forward.1} parent=0 // pred_check
    _
  $region43: #{lstm_net_forward.1} parent=0 // pred_check_branch
    %2300 = sbr.rel (0) target = $region45
  $region44: #{lstm_net_forward.1} parent=0 // pred_region
    _
  $region45: #{lstm_net_forward.1} parent=0 // pred_fallthru
    _
  // Predicated region
  $region46: #{lstm_net_forward.1} parent=0 // pred_check
    _
  $region47: #{lstm_net_forward.1} parent=0 // pred_check_branch
    %2302 = sbr.rel (0) target = $region49
  $region48: #{lstm_net_forward.1} parent=0 // pred_region
    _
  $region49: #{lstm_net_forward.1} parent=0 // pred_fallthru
    _
  // Predicated region
  $region50: #{lstm_net_forward.1} parent=0 // pred_check
    _
  $region51: #{lstm_net_forward.1} parent=0 // pred_check_branch
    %2304 = sbr.rel (0) target = $region53
  $region52: #{lstm_net_forward.1} parent=0 // pred_region
    _
  $region53: #{lstm_net_forward.1} parent=0 // pred_fallthru
    _
  // Predicated region
  $region54: #{lstm_net_forward.1} parent=0 // pred_check
    _
  $region55: #{lstm_net_forward.1} parent=0 // pred_check_branch
    %2306 = sbr.rel (0) target = $region57
  $region56: #{lstm_net_forward.1} parent=0 // pred_region
    _
  $region57: #{lstm_net_forward.1} parent=0 // pred_fallthru
    _
  // Predicated region
  $region58: #{lstm_net_forward.1} parent=0 // pred_check
    _
  $region59: #{lstm_net_forward.1} parent=0 // pred_check_branch
    %2308 = sbr.rel (0) target = $region61
  $region60: #{lstm_net_forward.1} parent=0 // pred_region
    _
  $region61: #{lstm_net_forward.1} parent=0 // pred_fallthru
    _
  // Predicated region
  $region62: #{lstm_net_forward.1} parent=0 // pred_check
    _
  $region63: #{lstm_net_forward.1} parent=0 // pred_check_branch
    %2310 = sbr.rel (0) target = $region65
  $region64: #{lstm_net_forward.1} parent=0 // pred_region
    _
  $region65: #{lstm_net_forward.1} parent=0 // pred_fallthru
    _

</llo_original>
